<compile_context>
chip_gen: v7x
topology: tpu7x:2x2x1
jax: 0.10.0
libtpu: 0.0.40
codegen_flags: <defaults>
</compile_context>

<pallas_src>
import functools
import math

import jax
import jax.numpy as jnp
from jax.experimental import pallas as pl
from jax.experimental.pallas import tpu as pltpu


def _lcm(a, b):
    return a * b // math.gcd(a, b)


def _conv_tile(x_ref, w0_ref, w1_ref, T):
    """Fused transposed-conv matmul on one per-batch [2*Cin, tile] input slab.

    x_ref block is (1, 2*Cin, tile):
      rows 0..Cin-1      : x[:, m,   t]  (zero-padded at m == F)
      rows Cin..2*Cin-1  : x[:, m-1, t]  (zero-padded at m == 0)
    lanes are the flat per-batch index m*T + t.  The kt == 1 taps need
    x[..., t-1]; that shift is built in-kernel (lane shift + t == 0 mask)
    instead of being materialized in HBM.

    Returns y [2*Cout, tile] f32 with per-channel-interleaved rows:
      row 2c   = even output-frequency rows (fo = 2m)   of channel c
      row 2c+1 = odd  output-frequency rows (fo = 2m+1) of channel c
    """
    x = x_ref[0].astype(jnp.float32)                     # [2*Cin, tile] f32
    # t-1 lane shift.  Tiles always start on a t == 0 boundary (tile_n % T == 0),
    # so zeroing every lane with (lane % T == 0) yields exactly x[..., t-1]
    # (zero where t-1 does not exist), with no cross-tile / cross-m leakage.
    xs = jnp.concatenate([jnp.zeros_like(x[:, :1]), x[:, :-1]], axis=1)
    lane = jax.lax.broadcasted_iota(jnp.int32, x.shape, 1)
    xs = jnp.where(lane % T != 0, xs, 0.0)
    # Two small MXU matmuls cover all 6 transposed-conv taps (f32 x f32 -> f32).
    y = jnp.dot(w0_ref[...], x, preferred_element_type=jnp.float32)
    y = y + jnp.dot(w1_ref[...], xs, preferred_element_type=jnp.float32)
    return y


def _stats_kernel(x_ref, w0_ref, w1_ref, sum_ref, ssq_ref, *, T):
    """Pass 1: per-batch sum / sum-of-squares of the conv output (training BN)."""
    y = _conv_tile(x_ref, w0_ref, w1_ref, T)

    @pl.when(pl.program_id(1) == 0)
    def _init():
        sum_ref[...] = jnp.zeros_like(sum_ref)
        ssq_ref[...] = jnp.zeros_like(ssq_ref)

    # Padding lanes and the unused odd row at m == F are exactly zero (zero
    # inputs / zero-packed weights), so they contribute nothing to the sums;
    # the wrapper divides by the true element count.
    sum_ref[0] = sum_ref[0] + jnp.sum(y, axis=1, keepdims=True)
    ssq_ref[0] = ssq_ref[0] + jnp.sum(y * y, axis=1, keepdims=True)


def _norm_kernel(x_ref, w0_ref, w1_ref, sc_ref, sh_ref, o_ref, *, T, is_last):
    """Pass 2: recompute conv output, apply the folded BN affine + activation."""
    y = _conv_tile(x_ref, w0_ref, w1_ref, T)
    z = y * sc_ref[...] + sh_ref[...]          # [2*Cout, 1] lane-broadcast affine
    if is_last:                                # ReLU
        o_ref[0] = jnp.maximum(z, 0.0)
    else:                                      # ELU(alpha=1)
        o_ref[0] = jnp.where(z > 0.0, z, jnp.exp(jnp.minimum(z, 0.0)) - 1.0)


def causal_trans_conv_block(x, weight, bias, gamma, beta, *, is_last=False,
                            eps=1e-5):
    """Forward pass of CausalTransConvBlock.

    x:      [B, Cin, F, T]     (NCHW, like PyTorch)
    weight: [Cin, Cout, 3, 2]  (PyTorch ConvTranspose2d weight layout)
    bias:   [Cout]  -- accepted for API parity; cancels exactly under
                       training-mode BatchNorm.
    gamma, beta: [Cout] BatchNorm affine parameters.
    Returns [B, Cout, 2*F + 1, T] float32.
    """
    del bias  # exactly cancelled by training-mode BatchNorm
    B, Cin, F, T = x.shape
    Cout = weight.shape[1]
    L = (F + 1) * T                               # per-batch flat (m, t) extent

    # ---- input: cast to bf16 FIRST, then build the two frequency views -----
    # (2x bf16 replication instead of the previous 4x f32; the t-1 shift is
    #  done in-kernel, and batch stays outermost -> no transpose pass.)
    xb = x.astype(jnp.bfloat16)
    zf = jnp.zeros((B, Cin, 1, T), jnp.bfloat16)
    xa = jnp.concatenate([xb, zf], axis=2)        # x[m]    (zero at m == F)
    xc = jnp.concatenate([zf, xb], axis=2)        # x[m-1]  (zero at m == 0)
    x2 = jnp.concatenate([xa, xc], axis=1).reshape(B, 2 * Cin, L)

    # ---- lane-tile size from a VMEM byte budget -----------------------------
    # double-buffered (bf16 input block + f32 output block) per lane
    bytes_per_lane = 2 * (2 * Cin * 2 + 2 * Cout * 4)
    budget = 24 * 1024 * 1024                     # < 32 MiB scoped VMEM, v7x-safe
    cap = max(128, (budget // bytes_per_lane) // 128 * 128)
    if L <= cap:
        tile_n, n_tiles = L, 1                    # full per-batch extent, 1 tile
    else:
        unit = _lcm(128, T)                       # tile starts stay at t == 0
        tile_n = max(unit, (cap // unit) * unit)
        n_tiles = pl.cdiv(L, tile_n)
    assert tile_n % T == 0
    L_pad = n_tiles * tile_n
    if L_pad != L:
        x2 = jnp.pad(x2, ((0, 0), (0, 0), (0, L_pad - L)))

    # ---- pack weights: per-channel-interleaved rows, split by time tap ------
    # W0 carries the kt == 0 taps, W1 the kt == 1 taps (applied to x[.., t-1]).
    w = weight.astype(jnp.float32)                # [Cin, Cout, 3, 2]

    def pack(kt):
        even = jnp.concatenate([w[:, :, 0, kt], w[:, :, 2, kt]], axis=0).T
        odd = jnp.concatenate([w[:, :, 1, kt],
                               jnp.zeros((Cin, Cout), jnp.float32)], axis=0).T
        # row 2c = even-row taps of channel c, row 2c+1 = odd-row taps
        return jnp.stack([even, odd], axis=1).reshape(2 * Cout, 2 * Cin)

    w0, w1 = pack(0), pack(1)

    x_spec = pl.BlockSpec((1, 2 * Cin, tile_n), lambda b, j: (b, 0, j))
    w_spec = pl.BlockSpec((2 * Cout, 2 * Cin), lambda b, j: (0, 0))
    vec_spec = pl.BlockSpec((2 * Cout, 1), lambda b, j: (0, 0))
    stat_spec = pl.BlockSpec((1, 2 * Cout, 1), lambda b, j: (b, 0, 0))

    # ---- call 1: BN statistics (batch axis parallel, tile axis = reduction) -
    sums, ssqs = pl.pallas_call(
        functools.partial(_stats_kernel, T=T),
        grid=(B, n_tiles),
        in_specs=[x_spec, w_spec, w_spec],
        out_specs=(stat_spec, stat_spec),
        out_shape=(jax.ShapeDtypeStruct((B, 2 * Cout, 1), jnp.float32),
                   jax.ShapeDtypeStruct((B, 2 * Cout, 1), jnp.float32)),
        compiler_params=pltpu.CompilerParams(
            dimension_semantics=("parallel", "arbitrary"),
            vmem_limit_bytes=32 * 1024 * 1024),
    )(x2, w0, w1)

    # ---- BN finalize once, in the wrapper (tiny [Cout] vectors) -------------
    count = float(B * (2 * F + 1) * T)
    s = jnp.sum(sums, axis=0)[:, 0].reshape(Cout, 2).sum(axis=1)   # fold even+odd
    q = jnp.sum(ssqs, axis=0)[:, 0].reshape(Cout, 2).sum(axis=1)
    mean = s / count
    var = jnp.maximum(q / count - mean * mean, 0.0)   # guard one-pass cancellation
    inv = jax.lax.rsqrt(var + eps)
    scale = gamma.astype(jnp.float32) * inv
    shift = beta.astype(jnp.float32) - mean * scale
    scale2 = jnp.repeat(scale, 2).reshape(2 * Cout, 1)   # rows 2c, 2c+1 -> channel c
    shift2 = jnp.repeat(shift, 2).reshape(2 * Cout, 1)

    # ---- call 2: normalize + activation + write (fully parallel grid) -------
    y = pl.pallas_call(
        functools.partial(_norm_kernel, T=T, is_last=is_last),
        grid=(B, n_tiles),
        in_specs=[x_spec, w_spec, w_spec, vec_spec, vec_spec],
        out_specs=pl.BlockSpec((1, 2 * Cout, tile_n), lambda b, j: (b, 0, j)),
        out_shape=jax.ShapeDtypeStruct((B, 2 * Cout, L_pad), jnp.float32),
        compiler_params=pltpu.CompilerParams(
            dimension_semantics=("parallel", "parallel"),   # megacore on v7x
            vmem_limit_bytes=32 * 1024 * 1024),
    )(x2, w0, w1, scale2, shift2)

    # ---- epilogue: even/odd row interleave (one reshape/transpose pass) -----
    out = y[:, :, :L].reshape(B, Cout, 2, F + 1, T)
    out = jnp.transpose(out, (0, 1, 3, 2, 4)).reshape(B, Cout, 2 * (F + 1), T)
    return out[:, :, :2 * F + 1, :]


def ref_forward(x, weight, bias, gamma, beta, *, is_last=False, x_round=None):
    """Pure-JAX reference (direct scatter definition of ConvTranspose2d)."""
    B, Cin, F, T = x.shape
    Cout = weight.shape[1]
    xc = x if x_round is None else x.astype(x_round).astype(jnp.float32)
    w = weight.astype(jnp.float32)
    out = jnp.zeros((B, Cout, 2 * F + 1, T + 1), jnp.float32)
    for kf in range(3):
        for kt in range(2):
            contrib = jnp.einsum('bcft,cd->bdft', xc, w[:, :, kf, kt])
            out = out.at[:, :, kf:kf + 2 * F:2, kt:kt + T].add(contrib)
    out = out + bias[None, :, None, None]
    out = out[:, :, :, :-1]
    mean = out.mean(axis=(0, 2, 3), keepdims=True)
    var = jnp.mean((out - mean) ** 2, axis=(0, 2, 3), keepdims=True)
    out = (out - mean) / jnp.sqrt(var + 1e-5) * gamma[None, :, None, None] \
        + beta[None, :, None, None]
    if is_last:
        return jnp.maximum(out, 0.0)
    return jnp.where(out > 0, out, jnp.exp(out) - 1.0)


if __name__ == "__main__":
    B, Cin, Cout, F, T = 2, 4, 6, 16, 8

    key = jax.random.PRNGKey(0)
    kx, kw, kb, kg, kbeta = jax.random.split(key, 5)
    x = jax.random.normal(kx, (B, Cin, F, T), dtype=jnp.float32)
    weight = 0.1 * jax.random.normal(kw, (Cin, Cout, 3, 2), dtype=jnp.float32)
    bias = 0.1 * jax.random.normal(kb, (Cout,), dtype=jnp.float32)
    gamma = 1.0 + 0.1 * jax.random.normal(kg, (Cout,), dtype=jnp.float32)
    beta = 0.05 * jax.random.normal(kbeta, (Cout,), dtype=jnp.float32)

    fwd = jax.jit(functools.partial(causal_trans_conv_block, is_last=False))
    out = jax.block_until_ready(fwd(x, weight, bias, gamma, beta))
    assert out.shape == (B, Cout, 2 * F + 1, T), out.shape

    # Strict check vs. a reference whose conv uses the same bf16-rounded x
    # (weights stay f32): identical arithmetic up to summation order and
    # one-pass-variance rounding.
    ref_matched = ref_forward(x, weight, bias, gamma, beta, is_last=False,
                              x_round=jnp.bfloat16)
    err_strict = float(jnp.max(jnp.abs(out - ref_matched)))
    assert err_strict < 5e-3, f"max abs error vs matched-precision ref {err_strict}"

    # Loose check vs. the full-f32 reference (only accounts for bf16 rounding
    # of the conv inputs).
    ref_f32 = ref_forward(x, weight, bias, gamma, beta, is_last=False)
    err_loose = float(jnp.max(jnp.abs(out - ref_f32)))
    assert err_loose < 1e-1, f"max abs error vs f32 ref {err_loose}"

    print("KERNEL_OK")
</pallas_src>

<mosaic_0001>
module attributes {stable_mosaic.version = 11 : i64} {
  func.func @_norm_kernel(%arg0: i32, %arg1: i32, %arg2: memref<1x8x136xbf16, #tpu.memory_space<vmem>>, %arg3: memref<12x8xf32, #tpu.memory_space<vmem>>, %arg4: memref<12x8xf32, #tpu.memory_space<vmem>>, %arg5: memref<12x1xf32, #tpu.memory_space<vmem>>, %arg6: memref<12x1xf32, #tpu.memory_space<vmem>>, %arg7: memref<1x12x136xf32, #tpu.memory_space<vmem>>) attributes {dimension_semantics = [#tpu.dimension_semantics<parallel>, #tpu.dimension_semantics<parallel>], iteration_bounds = array<i64: 2, 1>, scalar_prefetch = 0 : i64, scratch_operands = 0 : i64, tpu.core_type = #tpu.core_type<tc>, window_params = [{transform_indices = @transform_0, window_bounds = array<i64: 1, 8, 136>}, {pipeline_mode = #tpu.pipeline_mode<synchronous>, transform_indices = @transform_1, window_bounds = array<i64: 12, 8>}, {pipeline_mode = #tpu.pipeline_mode<synchronous>, transform_indices = @transform_2, window_bounds = array<i64: 12, 8>}, {pipeline_mode = #tpu.pipeline_mode<synchronous>, transform_indices = @transform_3, window_bounds = array<i64: 12, 1>}, {pipeline_mode = #tpu.pipeline_mode<synchronous>, transform_indices = @transform_4, window_bounds = array<i64: 12, 1>}, {transform_indices = @transform_5, window_bounds = array<i64: 1, 12, 136>}]} {
    %c0 = arith.constant 0 : index
    %c0_0 = arith.constant 0 : index
    %c0_1 = arith.constant 0 : index
    %0 = vector.load %arg2[%c0, %c0_0, %c0_1] : memref<1x8x136xbf16, #tpu.memory_space<vmem>>, vector<1x8x136xbf16>
    %1 = vector.shape_cast %0 : vector<1x8x136xbf16> to vector<8x136xbf16>
    %2 = arith.extf %1 : vector<8x136xbf16> to vector<8x136xf32>
    %cst = arith.constant 0.000000e+00 : f32
    %3 = vector.broadcast %cst : f32 to vector<8x1xf32>
    %4 = vector.extract_strided_slice %2 {offsets = [0, 0], sizes = [8, 135], strides = [1, 1]} : vector<8x136xf32> to vector<8x135xf32>
    %5 = tpu.concatenate %3, %4 in 1 : vector<8x1xf32>, vector<8x135xf32> -> vector<8x136xf32>
    %6 = tpu.iota {dimensions = array<i32: 1>} : vector<8x136xi32>
    %c8_i32 = arith.constant 8 : i32
    %c0_i32 = arith.constant 0 : i32
    %7 = arith.cmpi eq, %c8_i32, %c0_i32 : i32
    %c1_i32 = arith.constant 1 : i32
    %8 = arith.select %7, %c1_i32, %c8_i32 : i32
    %9 = vector.broadcast %8 : i32 to vector<8x136xi32>
    %10 = arith.remsi %6, %9 : vector<8x136xi32>
    %c0_i32_2 = arith.constant 0 : i32
    %11 = vector.broadcast %c0_i32_2 : i32 to vector<8x136xi32>
    %12 = arith.cmpi ne, %10, %11 : vector<8x136xi32>
    %c0_i32_3 = arith.constant 0 : i32
    %13 = vector.broadcast %c0_i32_3 : i32 to vector<8x136xi32>
    %14 = arith.cmpi slt, %10, %13 : vector<8x136xi32>
    %c0_i32_4 = arith.constant 0 : i32
    %15 = arith.cmpi slt, %8, %c0_i32_4 : i32
    %16 = vector.broadcast %15 : i1 to vector<8x136xi1>
    %17 = vector.broadcast %16 : vector<8x136xi1> to vector<8x136xi1>
    %18 = arith.xori %14, %17 : vector<8x136xi1>
    %19 = arith.andi %18, %12 : vector<8x136xi1>
    %20 = vector.broadcast %8 : i32 to vector<8x136xi32>
    %21 = arith.addi %10, %20 : vector<8x136xi32>
    %22 = arith.select %19, %21, %10 : vector<8x136xi1>, vector<8x136xi32>
    %c0_i32_5 = arith.constant 0 : i32
    %23 = vector.broadcast %c0_i32_5 : i32 to vector<8x136xi32>
    %24 = arith.cmpi ne, %22, %23 : vector<8x136xi32>
    %cst_6 = arith.constant 0.000000e+00 : f32
    %25 = vector.broadcast %cst_6 : f32 to vector<8x136xf32>
    %26 = arith.select %24, %5, %25 : vector<8x136xi1>, vector<8x136xf32>
    %c0_7 = arith.constant 0 : index
    %c0_8 = arith.constant 0 : index
    %27 = vector.load %arg3[%c0_7, %c0_8] : memref<12x8xf32, #tpu.memory_space<vmem>>, vector<12x8xf32>
    %cst_9 = arith.constant dense<0.000000e+00> : vector<12x136xf32>
    %28 = tpu.matmul %27, %2, %cst_9 {dimension_numbers = #tpu.dot_dimension_numbers<[1], [0], [0], [1], [0, 0, 1, 1], [], []>} : vector<12x8xf32>, vector<8x136xf32>, vector<12x136xf32> -> vector<12x136xf32>
    %c0_10 = arith.constant 0 : index
    %c0_11 = arith.constant 0 : index
    %29 = vector.load %arg4[%c0_10, %c0_11] : memref<12x8xf32, #tpu.memory_space<vmem>>, vector<12x8xf32>
    %cst_12 = arith.constant dense<0.000000e+00> : vector<12x136xf32>
    %30 = tpu.matmul %29, %26, %cst_12 {dimension_numbers = #tpu.dot_dimension_numbers<[1], [0], [0], [1], [0, 0, 1, 1], [], []>} : vector<12x8xf32>, vector<8x136xf32>, vector<12x136xf32> -> vector<12x136xf32>
    %31 = arith.addf %28, %30 : vector<12x136xf32>
    %c0_13 = arith.constant 0 : index
    %c0_14 = arith.constant 0 : index
    %32 = vector.load %arg5[%c0_13, %c0_14] : memref<12x1xf32, #tpu.memory_space<vmem>>, vector<12x1xf32>
    %33 = vector.broadcast %32 : vector<12x1xf32> to vector<12x136xf32>
    %34 = arith.mulf %31, %33 : vector<12x136xf32>
    %c0_15 = arith.constant 0 : index
    %c0_16 = arith.constant 0 : index
    %35 = vector.load %arg6[%c0_15, %c0_16] : memref<12x1xf32, #tpu.memory_space<vmem>>, vector<12x1xf32>
    %36 = vector.broadcast %35 : vector<12x1xf32> to vector<12x136xf32>
    %37 = arith.addf %34, %36 : vector<12x136xf32>
    %cst_17 = arith.constant 0.000000e+00 : f32
    %38 = vector.broadcast %cst_17 : f32 to vector<12x136xf32>
    %39 = arith.cmpf ogt, %37, %38 : vector<12x136xf32>
    %cst_18 = arith.constant 0.000000e+00 : f32
    %40 = vector.broadcast %cst_18 : f32 to vector<12x136xf32>
    %41 = arith.minimumf %37, %40 : vector<12x136xf32>
    %42 = math.exp %41 : vector<12x136xf32>
    %cst_19 = arith.constant 1.000000e+00 : f32
    %43 = vector.broadcast %cst_19 : f32 to vector<12x136xf32>
    %44 = arith.subf %42, %43 : vector<12x136xf32>
    %45 = arith.select %39, %37, %44 : vector<12x136xi1>, vector<12x136xf32>
    %c0_20 = arith.constant 0 : index
    %c0_21 = arith.constant 0 : index
    %c0_22 = arith.constant 0 : index
    %46 = vector.load %arg7[%c0_20, %c0_21, %c0_22] : memref<1x12x136xf32, #tpu.memory_space<vmem>>, vector<1x12x136xf32>
    %47 = vector.shape_cast %46 : vector<1x12x136xf32> to vector<12x136xf32>
    %48 = vector.shape_cast %45 : vector<12x136xf32> to vector<1x12x136xf32>
    tpu.vector_store %arg7[%c0_20, %c0_21, %c0_22], %48 {strides = array<i32>} : memref<1x12x136xf32, #tpu.memory_space<vmem>>, vector<1x12x136xf32>,
    return
  }
  func.func @transform_0(%arg0: i32, %arg1: i32) -> (i32, i32, i32) {
    %c0_i32 = arith.constant 0 : i32
    %c0_i32_0 = arith.constant 0 : i32
    return %arg0, %c0_i32, %arg1 : i32, i32, i32
  }
  func.func @transform_1(%arg0: i32, %arg1: i32) -> (i32, i32) {
    %c0_i32 = arith.constant 0 : i32
    %c0_i32_0 = arith.constant 0 : i32
    %c0_i32_1 = arith.constant 0 : i32
    return %c0_i32, %c0_i32_0 : i32, i32
  }
  func.func @transform_2(%arg0: i32, %arg1: i32) -> (i32, i32) {
    %c0_i32 = arith.constant 0 : i32
    %c0_i32_0 = arith.constant 0 : i32
    %c0_i32_1 = arith.constant 0 : i32
    return %c0_i32, %c0_i32_0 : i32, i32
  }
  func.func @transform_3(%arg0: i32, %arg1: i32) -> (i32, i32) {
    %c0_i32 = arith.constant 0 : i32
    %c0_i32_0 = arith.constant 0 : i32
    %c0_i32_1 = arith.constant 0 : i32
    return %c0_i32, %c0_i32_0 : i32, i32
  }
  func.func @transform_4(%arg0: i32, %arg1: i32) -> (i32, i32) {
    %c0_i32 = arith.constant 0 : i32
    %c0_i32_0 = arith.constant 0 : i32
    %c0_i32_1 = arith.constant 0 : i32
    return %c0_i32, %c0_i32_0 : i32, i32
  }
  func.func @transform_5(%arg0: i32, %arg1: i32) -> (i32, i32, i32) {
    %c0_i32 = arith.constant 0 : i32
    %c0_i32_0 = arith.constant 0 : i32
    return %arg0, %c0_i32, %arg1 : i32, i32, i32
  }
}

module attributes {stable_mosaic.version = 11 : i64} {
  func.func @_stats_kernel(%arg0: i32, %arg1: i32, %arg2: memref<1x8x136xbf16, #tpu.memory_space<vmem>>, %arg3: memref<12x8xf32, #tpu.memory_space<vmem>>, %arg4: memref<12x8xf32, #tpu.memory_space<vmem>>, %arg5: memref<1x12x1xf32, #tpu.memory_space<vmem>>, %arg6: memref<1x12x1xf32, #tpu.memory_space<vmem>>) attributes {dimension_semantics = [#tpu.dimension_semantics<parallel>, #tpu.dimension_semantics<arbitrary>], iteration_bounds = array<i64: 2, 1>, scalar_prefetch = 0 : i64, scratch_operands = 0 : i64, tpu.core_type = #tpu.core_type<tc>, window_params = [{transform_indices = @transform_0, window_bounds = array<i64: 1, 8, 136>}, {pipeline_mode = #tpu.pipeline_mode<synchronous>, transform_indices = @transform_1, window_bounds = array<i64: 12, 8>}, {pipeline_mode = #tpu.pipeline_mode<synchronous>, transform_indices = @transform_2, window_bounds = array<i64: 12, 8>}, {transform_indices = @transform_3, window_bounds = array<i64: 1, 12, 1>}, {transform_indices = @transform_4, window_bounds = array<i64: 1, 12, 1>}]} {
    %c0 = arith.constant 0 : index
    %c0_0 = arith.constant 0 : index
    %c0_1 = arith.constant 0 : index
    %0 = vector.load %arg2[%c0, %c0_0, %c0_1] : memref<1x8x136xbf16, #tpu.memory_space<vmem>>, vector<1x8x136xbf16>
    %1 = vector.shape_cast %0 : vector<1x8x136xbf16> to vector<8x136xbf16>
    %2 = arith.extf %1 : vector<8x136xbf16> to vector<8x136xf32>
    %cst = arith.constant 0.000000e+00 : f32
    %3 = vector.broadcast %cst : f32 to vector<8x1xf32>
    %4 = vector.extract_strided_slice %2 {offsets = [0, 0], sizes = [8, 135], strides = [1, 1]} : vector<8x136xf32> to vector<8x135xf32>
    %5 = tpu.concatenate %3, %4 in 1 : vector<8x1xf32>, vector<8x135xf32> -> vector<8x136xf32>
    %6 = tpu.iota {dimensions = array<i32: 1>} : vector<8x136xi32>
    %c8_i32 = arith.constant 8 : i32
    %c0_i32 = arith.constant 0 : i32
    %7 = arith.cmpi eq, %c8_i32, %c0_i32 : i32
    %c1_i32 = arith.constant 1 : i32
    %8 = arith.select %7, %c1_i32, %c8_i32 : i32
    %9 = vector.broadcast %8 : i32 to vector<8x136xi32>
    %10 = arith.remsi %6, %9 : vector<8x136xi32>
    %c0_i32_2 = arith.constant 0 : i32
    %11 = vector.broadcast %c0_i32_2 : i32 to vector<8x136xi32>
    %12 = arith.cmpi ne, %10, %11 : vector<8x136xi32>
    %c0_i32_3 = arith.constant 0 : i32
    %13 = vector.broadcast %c0_i32_3 : i32 to vector<8x136xi32>
    %14 = arith.cmpi slt, %10, %13 : vector<8x136xi32>
    %c0_i32_4 = arith.constant 0 : i32
    %15 = arith.cmpi slt, %8, %c0_i32_4 : i32
    %16 = vector.broadcast %15 : i1 to vector<8x136xi1>
    %17 = vector.broadcast %16 : vector<8x136xi1> to vector<8x136xi1>
    %18 = arith.xori %14, %17 : vector<8x136xi1>
    %19 = arith.andi %18, %12 : vector<8x136xi1>
    %20 = vector.broadcast %8 : i32 to vector<8x136xi32>
    %21 = arith.addi %10, %20 : vector<8x136xi32>
    %22 = arith.select %19, %21, %10 : vector<8x136xi1>, vector<8x136xi32>
    %c0_i32_5 = arith.constant 0 : i32
    %23 = vector.broadcast %c0_i32_5 : i32 to vector<8x136xi32>
    %24 = arith.cmpi ne, %22, %23 : vector<8x136xi32>
    %cst_6 = arith.constant 0.000000e+00 : f32
    %25 = vector.broadcast %cst_6 : f32 to vector<8x136xf32>
    %26 = arith.select %24, %5, %25 : vector<8x136xi1>, vector<8x136xf32>
    %c0_7 = arith.constant 0 : index
    %c0_8 = arith.constant 0 : index
    %27 = vector.load %arg3[%c0_7, %c0_8] : memref<12x8xf32, #tpu.memory_space<vmem>>, vector<12x8xf32>
    %cst_9 = arith.constant dense<0.000000e+00> : vector<12x136xf32>
    %28 = tpu.matmul %27, %2, %cst_9 {dimension_numbers = #tpu.dot_dimension_numbers<[1], [0], [0], [1], [0, 0, 1, 1], [], []>} : vector<12x8xf32>, vector<8x136xf32>, vector<12x136xf32> -> vector<12x136xf32>
    %c0_10 = arith.constant 0 : index
    %c0_11 = arith.constant 0 : index
    %29 = vector.load %arg4[%c0_10, %c0_11] : memref<12x8xf32, #tpu.memory_space<vmem>>, vector<12x8xf32>
    %cst_12 = arith.constant dense<0.000000e+00> : vector<12x136xf32>
    %30 = tpu.matmul %29, %26, %cst_12 {dimension_numbers = #tpu.dot_dimension_numbers<[1], [0], [0], [1], [0, 0, 1, 1], [], []>} : vector<12x8xf32>, vector<8x136xf32>, vector<12x136xf32> -> vector<12x136xf32>
    %31 = arith.addf %28, %30 : vector<12x136xf32>
    %c0_i32_13 = arith.constant 0 : i32
    %32 = arith.cmpi eq, %arg1, %c0_i32_13 : i32
    %33 = arith.extui %32 : i1 to i32
    %c0_i32_14 = arith.constant 0 : i32
    %34 = arith.cmpi ne, %33, %c0_i32_14 : i32
    scf.if %34 {
      %cst_29 = arith.constant 0.000000e+00 : f32
      %52 = vector.broadcast %cst_29 : f32 to vector<1x12x1xf32>
      %c0_30 = arith.constant 0 : index
      %c0_31 = arith.constant 0 : index
      %c0_32 = arith.constant 0 : index
      %53 = vector.load %arg5[%c0_30, %c0_31, %c0_32] : memref<1x12x1xf32, #tpu.memory_space<vmem>>, vector<1x12x1xf32>
      tpu.vector_store %arg5[%c0_30, %c0_31, %c0_32], %52 {strides = array<i32>} : memref<1x12x1xf32, #tpu.memory_space<vmem>>, vector<1x12x1xf32>,
      %cst_33 = arith.constant 0.000000e+00 : f32
      %54 = vector.broadcast %cst_33 : f32 to vector<1x12x1xf32>
      %c0_34 = arith.constant 0 : index
      %c0_35 = arith.constant 0 : index
      %c0_36 = arith.constant 0 : index
      %55 = vector.load %arg6[%c0_34, %c0_35, %c0_36] : memref<1x12x1xf32, #tpu.memory_space<vmem>>, vector<1x12x1xf32>
      tpu.vector_store %arg6[%c0_34, %c0_35, %c0_36], %54 {strides = array<i32>} : memref<1x12x1xf32, #tpu.memory_space<vmem>>, vector<1x12x1xf32>,
    } else {
    }
    %c0_15 = arith.constant 0 : index
    %c0_16 = arith.constant 0 : index
    %c0_17 = arith.constant 0 : index
    %35 = vector.load %arg5[%c0_15, %c0_16, %c0_17] : memref<1x12x1xf32, #tpu.memory_space<vmem>>, vector<1x12x1xf32>
    %36 = vector.shape_cast %35 : vector<1x12x1xf32> to vector<12x1xf32>
    %cst_18 = arith.constant dense<0.000000e+00> : vector<12xf32>
    %37 = vector.multi_reduction <add>, %31, %cst_18 [1] : vector<12x136xf32> to vector<12xf32>
    %38 = vector.shape_cast %37 : vector<12xf32> to vector<12x1xf32>
    %39 = arith.addf %36, %38 : vector<12x1xf32>
    %c0_19 = arith.constant 0 : index
    %c0_20 = arith.constant 0 : index
    %c0_21 = arith.constant 0 : index
    %40 = vector.load %arg5[%c0_19, %c0_20, %c0_21] : memref<1x12x1xf32, #tpu.memory_space<vmem>>, vector<1x12x1xf32>
    %41 = vector.shape_cast %40 : vector<1x12x1xf32> to vector<12x1xf32>
    %42 = vector.shape_cast %39 : vector<12x1xf32> to vector<1x12x1xf32>
    tpu.vector_store %arg5[%c0_19, %c0_20, %c0_21], %42 {strides = array<i32>} : memref<1x12x1xf32, #tpu.memory_space<vmem>>, vector<1x12x1xf32>,
    %c0_22 = arith.constant 0 : index
    %c0_23 = arith.constant 0 : index
    %c0_24 = arith.constant 0 : index
    %43 = vector.load %arg6[%c0_22, %c0_23, %c0_24] : memref<1x12x1xf32, #tpu.memory_space<vmem>>, vector<1x12x1xf32>
    %44 = vector.shape_cast %43 : vector<1x12x1xf32> to vector<12x1xf32>
    %45 = arith.mulf %31, %31 : vector<12x136xf32>
    %cst_25 = arith.constant dense<0.000000e+00> : vector<12xf32>
    %46 = vector.multi_reduction <add>, %45, %cst_25 [1] : vector<12x136xf32> to vector<12xf32>
    %47 = vector.shape_cast %46 : vector<12xf32> to vector<12x1xf32>
    %48 = arith.addf %44, %47 : vector<12x1xf32>
    %c0_26 = arith.constant 0 : index
    %c0_27 = arith.constant 0 : index
    %c0_28 = arith.constant 0 : index
    %49 = vector.load %arg6[%c0_26, %c0_27, %c0_28] : memref<1x12x1xf32, #tpu.memory_space<vmem>>, vector<1x12x1xf32>
    %50 = vector.shape_cast %49 : vector<1x12x1xf32> to vector<12x1xf32>
    %51 = vector.shape_cast %48 : vector<12x1xf32> to vector<1x12x1xf32>
    tpu.vector_store %arg6[%c0_26, %c0_27, %c0_28], %51 {strides = array<i32>} : memref<1x12x1xf32, #tpu.memory_space<vmem>>, vector<1x12x1xf32>,
    return
  }
  func.func @transform_0(%arg0: i32, %arg1: i32) -> (i32, i32, i32) {
    %c0_i32 = arith.constant 0 : i32
    %c0_i32_0 = arith.constant 0 : i32
    return %arg0, %c0_i32, %arg1 : i32, i32, i32
  }
  func.func @transform_1(%arg0: i32, %arg1: i32) -> (i32, i32) {
    %c0_i32 = arith.constant 0 : i32
    %c0_i32_0 = arith.constant 0 : i32
    %c0_i32_1 = arith.constant 0 : i32
    return %c0_i32, %c0_i32_0 : i32, i32
  }
  func.func @transform_2(%arg0: i32, %arg1: i32) -> (i32, i32) {
    %c0_i32 = arith.constant 0 : i32
    %c0_i32_0 = arith.constant 0 : i32
    %c0_i32_1 = arith.constant 0 : i32
    return %c0_i32, %c0_i32_0 : i32, i32
  }
  func.func @transform_3(%arg0: i32, %arg1: i32) -> (i32, i32, i32) {
    %c0_i32 = arith.constant 0 : i32
    %c0_i32_0 = arith.constant 0 : i32
    %c0_i32_1 = arith.constant 0 : i32
    return %arg0, %c0_i32, %c0_i32_0 : i32, i32, i32
  }
  func.func @transform_4(%arg0: i32, %arg1: i32) -> (i32, i32, i32) {
    %c0_i32 = arith.constant 0 : i32
    %c0_i32_0 = arith.constant 0 : i32
    %c0_i32_1 = arith.constant 0 : i32
    return %arg0, %c0_i32, %c0_i32_0 : i32, i32, i32
  }
}

</mosaic_0001>

<llo_original>
// kernel: squeeze.14
$region0: #{squeeze.14}
  %s0 = inlined_call_operand.vmem [shape: f32[12], index: 0, kind: input, shape index: {}]
  %s1 = inlined_call_operand.vmem [shape: f32[6,2], index: 1, kind: output, shape index: {}]
  $region1: #{squeeze.14} parent=0
    #allocation0 [shape = 'u8[4096]{0}', space=vmem, size = 0x1000, scoped, tag = 'scoped mem for input reshape']
    %s3 = sshllo.u32 0, 1
    %v4 = vld [vmem:[%s0] sm:%s3]
    %5 = vst [vmem:[#allocation0] sm:%s3] %v4
    %v6 = vld [vmem:[#allocation0] sm:$0x1]
    %vm7 = vcmask 15360
    %8 = vst.msk [vmem:[%s1] sm:$0x1] %vm7, %v6
    %v9 = vld [vmem:[#allocation0] sm:$0x1]
    %10 = vrot.lane.b32.xlu0 %v9, 126
    %v11 = vpop.permute.xlu0 %10
    %vm12 = vcmask 15360
    %s13 = scalar_lea.vmem %s1, 1
    %14 = vst.msk [vmem:[%s13] sm:$0x1] %vm12, %v11
    %v15 = vld [vmem:[#allocation0] sm:$0x1]
    %16 = vrot.lane.b32.xlu0 %v15, 124
    %v17 = vpop.permute.xlu0 %16
    %vm18 = vcmask 15360
    %s19 = scalar_lea.vmem %s1, 2
    %20 = vst.msk [vmem:[%s19] sm:$0x1] %vm18, %v17
    %v21 = vld [vmem:[#allocation0] sm:$0x1]
    %22 = vrot.lane.b32.xlu0 %v21, 122
    %v23 = vpop.permute.xlu0 %22
    %vm24 = vcmask 15360
    %s25 = scalar_lea.vmem %s1, 3
    %26 = vst.msk [vmem:[%s25] sm:$0x1] %vm24, %v23
    %v27 = vld [vmem:[#allocation0] sm:$0x1]
    %28 = vrot.lane.b32.xlu0 %v27, 120
    %v29 = vpop.permute.xlu0 %28
    %vm30 = vcmask 15360
    %s31 = scalar_lea.vmem %s1, 4
    %32 = vst.msk [vmem:[%s31] sm:$0x1] %vm30, %v29
    %v33 = vld [vmem:[#allocation0] sm:$0x1]
    %34 = vrot.lane.b32.xlu0 %v33, 118
    %v35 = vpop.permute.xlu0 %34
    %vm36 = vcmask 15360
    %s37 = scalar_lea.vmem %s1, 5
    %38 = vst.msk [vmem:[%s37] sm:$0x1] %vm36, %v35

// kernel: causal_trans_conv_block.2
$region0: #{causal_trans_conv_block.2}
  #allocation0 [shape = 'u32[]', space=smem, size = 0x4, offset = 0x4, fixed_abs, tag = 'smem constant byte address 0x4 - core index']
  #allocation1 [shape = 'u32[144,128]{1,0:T(1,128)}', space=vmem, size = 0x12000, scoped, tag = 'internal scratch']
  %s0 = inlined_call_operand.vmem [shape: bf16[2,8,136], index: 0, kind: input, shape index: {}]
  %s1 = inlined_call_operand.vmem [shape: f32[12,8], index: 1, kind: input, shape index: {}]
  %s2 = inlined_call_operand.vmem [shape: f32[12,8], index: 2, kind: input, shape index: {}]
  %s3 = inlined_call_operand.vmem [shape: f32[2,12,1], index: 3, kind: output, shape index: {0}]
  %s4 = inlined_call_operand.vmem [shape: f32[2,12,1], index: 4, kind: output, shape index: {1}]
  %5 = xla_tuple %s3, %s4
  %s6 = sld [smem:[#allocation0]]
  $region57: #{causal_trans_conv_block.2} parent=0
    _
  %s8 = ssub.s32 1, %s6
  %s9 = scalar_select 0, %s8, %s6
  loop: start=0, step=1, limit=4
  $region2: #{causal_trans_conv_block.2} parent=0 // loop_pre_header
    _
  $region3: #{causal_trans_conv_block.2} parent=0 // loop_header
    %s11 = sphi 0, %s15
    %p12 = scmp.ge.s32.totalorder %s11, 4
    %s18 = sphi 0, %s30
    %s19 = sphi 0, %s26
    %s20 = sphi 0, %s18
    %s21 = sphi 0, %s19
    %s22 = sphi 0, %s20
    %s23 = sphi 0, %s21
    %s35 = sphi 0, %s37
    %s38 = sphi 0, %s35
    %s39 = sphi 0, %s38
    %s55 = sphi 0, %s39
    %s59 = sphi 0, %s59
    %s61 = sphi 0, %s59
    %s62 = sphi 0, %s61
    %s76 = sphi 0, %s62
    %s80 = sphi 0, %s80
    %s82 = sphi 0, %s80
    %s83 = sphi 0, %s82
    %s97 = sphi 0, %s83
    %s103 = sphi 0, %s105
    %s106 = sphi 0, %s103
    %s107 = sphi 0, %s106
    %s123 = sphi 0, %s107
    %s129 = sphi 0, %s131
    %s132 = sphi 0, %s129
    %s133 = sphi 0, %s132
    %s149 = sphi 0, %s133
  $region4: #{causal_trans_conv_block.2} parent=0 // loop_header_branch
    %14 = sbr.rel (%p12) target = $region8
  $region5: #{causal_trans_conv_block.2} parent=0 // loop_body
    %s16 = ssub.s32 %s11, 1
    %s17 = ssub.s32 %s11, 2
    %s24 = sadd.s32 1, %s19
    %p25 = scmp.ge.s32.totalorder %s24, 1
    %s26 = scalar_select %p25, 0, %s24
    %s27 = sadd.s32 1, %s18
    %s28 = scalar_select %p25, %s27, %s18
    %p29 = scmp.ge.s32.totalorder %s28, 2
    %s30 = scalar_select %p29, 0, %s28
    %s31 = ssub.s32 %s18, %s30
    %s32 = ssub.s32 %s19, %s26
    %s33 = sor.u32 %s31, %s32
    %p34 = scmp.eq.s32.totalorder %s33, 0
    %s36 = sadd.s32 %s35, 1
    %s37 = scalar_select %p34, %s35, %s36
    %p40 = pneg %p34
    %p41 = scmp.eq.s32.totalorder %s11, 1
    %p42 = por %p40, %p41
    %p43 = scmp.ne.s32.totalorder %s35, %s38
    %p44 = scmp.eq.s32.totalorder %s11, 0
    %p45 = por %p43, %p44
    %p46 = scmp.ne.s32.totalorder %s35, %s38
    %p47 = scmp.eq.s32.totalorder %s16, 1
    %p48 = por %p46, %p47
    %p49 = scmp.ne.s32.totalorder %s38, %s39
    %p50 = scmp.eq.s32.totalorder %s16, 0
    %p51 = por %p49, %p50
    %p52 = scmp.ne.s32.totalorder %s38, %s39
    %p53 = scmp.eq.s32.totalorder %s17, 1
    %p54 = por %p52, %p53
    %p56 = scmp.ne.s32.totalorder %s39, %s55
    %p57 = scmp.eq.s32.totalorder %s17, 0
    %p58 = por %p56, %p57
    %s60 = sadd.s32 %s59, 1
    %p63 = scmp.eq.s32.totalorder %s11, 1
    %p64 = scmp.ne.s32.totalorder %s59, %s61
    %p65 = scmp.eq.s32.totalorder %s11, 0
    %p66 = por %p64, %p65
    %p67 = scmp.ne.s32.totalorder %s59, %s61
    %p68 = scmp.eq.s32.totalorder %s16, 1
    %p69 = por %p67, %p68
    %p70 = scmp.ne.s32.totalorder %s61, %s62
    %p71 = scmp.eq.s32.totalorder %s16, 0
    %p72 = por %p70, %p71
    %p73 = scmp.ne.s32.totalorder %s61, %s62
    %p74 = scmp.eq.s32.totalorder %s17, 1
    %p75 = por %p73, %p74
    %p77 = scmp.ne.s32.totalorder %s62, %s76
    %p78 = scmp.eq.s32.totalorder %s17, 0
    %p79 = por %p77, %p78
    %s81 = sadd.s32 %s80, 1
    %p84 = scmp.eq.s32.totalorder %s11, 1
    %p85 = scmp.ne.s32.totalorder %s80, %s82
    %p86 = scmp.eq.s32.totalorder %s11, 0
    %p87 = por %p85, %p86
    %p88 = scmp.ne.s32.totalorder %s80, %s82
    %p89 = scmp.eq.s32.totalorder %s16, 1
    %p90 = por %p88, %p89
    %p91 = scmp.ne.s32.totalorder %s82, %s83
    %p92 = scmp.eq.s32.totalorder %s16, 0
    %p93 = por %p91, %p92
    %p94 = scmp.ne.s32.totalorder %s82, %s83
    %p95 = scmp.eq.s32.totalorder %s17, 1
    %p96 = por %p94, %p95
    %p98 = scmp.ne.s32.totalorder %s83, %s97
    %p99 = scmp.eq.s32.totalorder %s17, 0
    %p100 = por %p98, %p99
    %s101 = ssub.s32 %s18, %s30
    %p102 = scmp.eq.s32.totalorder %s101, 0
    %s104 = sadd.s32 %s103, 1
    %s105 = scalar_select %p102, %s103, %s104
    %p108 = pneg %p102
    %p109 = scmp.eq.s32.totalorder %s11, 1
    %p110 = por %p108, %p109
    %p111 = scmp.ne.s32.totalorder %s103, %s106
    %p112 = scmp.eq.s32.totalorder %s11, 0
    %p113 = por %p111, %p112
    %p114 = scmp.ne.s32.totalorder %s103, %s106
    %p115 = scmp.eq.s32.totalorder %s16, 1
    %p116 = por %p114, %p115
    %p117 = scmp.ne.s32.totalorder %s106, %s107
    %p118 = scmp.eq.s32.totalorder %s16, 0
    %p119 = por %p117, %p118
    %p120 = scmp.ne.s32.totalorder %s106, %s107
    %p121 = scmp.eq.s32.totalorder %s17, 1
    %p122 = por %p120, %p121
    %p124 = scmp.ne.s32.totalorder %s107, %s123
    %p125 = scmp.eq.s32.totalorder %s17, 0
    %p126 = por %p124, %p125
    %s127 = ssub.s32 %s18, %s30
    %p128 = scmp.eq.s32.totalorder %s127, 0
    %s130 = sadd.s32 %s129, 1
    %s131 = scalar_select %p128, %s129, %s130
    %p134 = pneg %p128
    %p135 = scmp.eq.s32.totalorder %s11, 1
    %p136 = por %p134, %p135
    %p137 = scmp.ne.s32.totalorder %s129, %s132
    %p138 = scmp.eq.s32.totalorder %s11, 0
    %p139 = por %p137, %p138
    %p140 = scmp.ne.s32.totalorder %s129, %s132
    %p141 = scmp.eq.s32.totalorder %s16, 1
    %p142 = por %p140, %p141
    %p143 = scmp.ne.s32.totalorder %s132, %s133
    %p144 = scmp.eq.s32.totalorder %s16, 0
    %p145 = por %p143, %p144
    %p146 = scmp.ne.s32.totalorder %s132, %s133
    %p147 = scmp.eq.s32.totalorder %s17, 1
    %p148 = por %p146, %p147
    %p150 = scmp.ne.s32.totalorder %s133, %s149
    %p151 = scmp.eq.s32.totalorder %s17, 0
    %p152 = por %p150, %p151
    %p153 = scmp.le.s32.totalorder 1, %s11
    %p154 = scmp.lt.s32.totalorder %s11, 3
    %p155 = pnand %p153, %p154
    %p156 = pneg %p155
    // Predicated region
    $region9: #{causal_trans_conv_block.2} parent=5 // pred_check
      _
    $region10: #{causal_trans_conv_block.2} parent=5 // pred_check_branch
      %158 = sbr.rel (%p155) target = $region12
    $region11: #{causal_trans_conv_block.2} parent=5 // pred_region
      %s159 = ssub.s32 %s11, 1
      // Predicated region
      $region13: #{causal_trans_conv_block.2} parent=11 // pred_check
        %p160 = pneg %p72
      $region14: #{causal_trans_conv_block.2} parent=11 // pred_check_branch
        %162 = sbr.rel (%p160) target = $region16
      $region15: #{causal_trans_conv_block.2} parent=11 // pred_region
        _
      $region16: #{causal_trans_conv_block.2} parent=11 // pred_fallthru
        _
      // Predicated region
      $region17: #{causal_trans_conv_block.2} parent=11 // pred_check
        %p163 = pneg %p93
      $region18: #{causal_trans_conv_block.2} parent=11 // pred_check_branch
        %165 = sbr.rel (%p163) target = $region20
      $region19: #{causal_trans_conv_block.2} parent=11 // pred_region
        _
      $region20: #{causal_trans_conv_block.2} parent=11 // pred_fallthru
        _
    $region12: #{causal_trans_conv_block.2} parent=5 // pred_fallthru
      _
    %p166 = scmp.lt.s32.totalorder %s11, 2
    // Predicated region
    $region21: #{causal_trans_conv_block.2} parent=5 // pred_check
      %p167 = pneg %p166
    $region22: #{causal_trans_conv_block.2} parent=5 // pred_check_branch
      %169 = sbr.rel (%p167) target = $region24
    $region23: #{causal_trans_conv_block.2} parent=5 // pred_region
      // Predicated region
      $region25: #{causal_trans_conv_block.2} parent=23 // pred_check
        %p170 = pneg %p45
      $region26: #{causal_trans_conv_block.2} parent=23 // pred_check_branch
        %172 = sbr.rel (%p170) target = $region28
      $region27: #{causal_trans_conv_block.2} parent=23 // pred_region
        %s173 = smul.u32 2, %s19
        %p174 = scmp.lt.s32.totalorder %s18, 1
        %s175 = scalar_select %p174, %s18, 1
        %p176 = scmp.lt.s32.totalorder %s173, 1
        %s177 = scalar_select %p176, %s173, 1
        %s178 = smul.addr %s175, 2
        %s179 = sadd.s32 %s177, %s178
        %s180 = smul.addr %s179, 4
        %s181 = scalar_lea.vmem %s0, %s180
        %s182 = smul.u32 2, %s19
      $region28: #{causal_trans_conv_block.2} parent=23 // pred_fallthru
        _
    $region24: #{causal_trans_conv_block.2} parent=5 // pred_fallthru
      _
    %p183 = scmp.le.s32.totalorder 1, %s11
    %p184 = scmp.lt.s32.totalorder %s11, 3
    %p185 = pnand %p183, %p184
    %p186 = pneg %p185
    // Predicated region
    $region29: #{causal_trans_conv_block.2} parent=5 // pred_check
      _
    $region30: #{causal_trans_conv_block.2} parent=5 // pred_check_branch
      %188 = sbr.rel (%p185) target = $region32
    $region31: #{causal_trans_conv_block.2} parent=5 // pred_region
      %s189 = ssub.s32 %s11, 1
      %s190 = smul.u32 2, %s21
      %p191 = scmp.lt.s32.totalorder %s20, 1
      %s192 = scalar_select %p191, %s20, 1
      %p193 = scmp.lt.s32.totalorder %s190, 1
      %s194 = scalar_select %p193, %s190, 1
      %s195 = smul.addr %s192, 2
      %s196 = sadd.s32 %s194, %s195
      %s197 = smul.addr %s196, 4
      %s198 = scalar_lea.vmem %s0, %s197
      %p199 = pneg %p51
      %p200 = pneg %p48
      %p201 = pneg %p72
      %p202 = pneg %p69
      %p203 = pneg %p93
      %p204 = pneg %p90
      %p205 = pneg %p119
      %p206 = pneg %p116
      %p207 = scmp.lt.s32.totalorder %s20, 1
      %s208 = scalar_select %p207, %s20, 1
      %s209 = smul.addr %s208, 2
      %s210 = smul.addr %s209, 8
      %s211 = scalar_lea.vmem %s3, %s210
      %p212 = pneg %p145
      %p213 = pneg %p142
      %p214 = scmp.lt.s32.totalorder %s20, 1
      %s215 = scalar_select %p214, %s20, 1
      %s216 = smul.addr %s215, 2
      %s217 = smul.addr %s216, 8
      %s218 = scalar_lea.vmem %s4, %s217
      %s219 = smul.u32 2, %s21
      %p220 = scmp.lt.s32.totalorder %s20, 1
      %s221 = scalar_select %p220, %s20, 1
      %p222 = scmp.lt.s32.totalorder %s219, 1
      %s223 = scalar_select %p222, %s219, 1
      %s224 = smul.addr %s221, 2
      %s225 = sadd.s32 %s223, %s224
      %s226 = smul.addr %s225, 4
      %s227 = scalar_lea.vmem %s0, %s226
      %s228 = smul.u32 2, %s21
      %p229 = scmp.lt.s32.totalorder %s20, 1
      %s230 = scalar_select %p229, %s20, 1
      %s231 = smul.addr %s230, 2
      %s232 = smul.addr %s231, 8
      %s233 = scalar_lea.vmem %s3, %s232
      %p234 = scmp.lt.s32.totalorder %s20, 1
      %s235 = scalar_select %p234, %s20, 1
      %s236 = smul.addr %s235, 2
      %s237 = smul.addr %s236, 8
      %s238 = scalar_lea.vmem %s4, %s237
      %v239 = vld [vmem:[%s227] sm:$0xff]
      %v240 = vunpack.c.l.bf16 %v239
      %v241 = vunpack.c.h.bf16 %v239
      %244 = vrot.lane.b32.xlu0 %v240, 1
      %v245 = vpop.permute.xlu0 %244
      %246 = vrot.lane.b32.xlu0 %v241, 1
      %v247 = vpop.permute.xlu0 %246
      %vm248 = vcmask 7168
      %v249 = vsel %vm248, %v245, %v247
      %v252 = vsel %vm248, 0.0, %v245
      %v253 = vlaneseq
      %v254 = vand.u32 %v253, 127
      %v255 = vadd.s32 %v254, 128
      %vm256 = vcmp.lt.s32.totalorder %v254, 0
      %v257 = vsub.s32 0, %v254
      %v258 = vsel %vm256, %v257, %v254
      %v259 = vshrl.u32 %v258, 3
      %v260 = vand.u32 %v258, 7
      %v261 = vsub.s32 0, %v260
      %v262 = vsel %vm256, %v261, %v260
      %vm263 = vcmp.lt.s32.totalorder %v255, 0
      %v264 = vsub.s32 0, %v255
      %v265 = vsel %vm263, %v264, %v255
      %v266 = vshrl.u32 %v265, 3
      %v267 = vand.u32 %v265, 7
      %v268 = vsub.s32 0, %v267
      %v269 = vsel %vm263, %v268, %v267
      %vm270 = vcmp.ne.s32.totalorder %v262, 0
      %vm271 = vcmp.ne.s32.totalorder %v269, 0
      %vm272 = vcmp.lt.s32.totalorder %v262, 0
      %vm273 = vcmp.lt.s32.totalorder %v269, 0
      %vm274 = vmand %vm272, %vm270
      %vm275 = vmand %vm273, %vm271
      %v276 = vadd.s32 %v262, 8
      %v277 = vadd.s32 %v269, 8
      %v278 = vsel %vm274, %v276, %v262
      %v279 = vsel %vm275, %v277, %v269
      %vm280 = vcmp.ne.s32.totalorder %v278, 0
      %vm281 = vcmp.ne.s32.totalorder %v279, 0
      %v282 = vsel %vm280, %v252, 0.0
      %v283 = vsel %vm281, %v249, 0.0
      %v284 = vld [vmem:[%s1] sm:$0xff]
      %v285 = vld [vmem:[%s1 + $0x8] sm:$0xf]
      %v286 = vld [vmem:[%s2] sm:$0xff]
      %v287 = vld [vmem:[%s2 + $0x8] sm:$0xf]
      %vm288 = vcmask 64512
      %v290 = vsel %vm288, %v286, 0
      %v293 = vsel %vm288, %v287, 0
      %295 = vmatprep.subr.mxu0 %v283
      %296 = vmatpush1.msra.mxu0 %v282
      %297 = vmatprep.subr.mxu0 0.0
      %298 = vmatpush1.msra.mxu0 0.0
      %299 = vmatprep.subr.mxu0 0.0
      %300 = vmatpush1.msra.mxu0 0.0
      %301 = vmatprep.subr.mxu0 0.0
      %302 = vmatpush1.msra.mxu0 0.0
      %303 = vmatprep.subr.mxu0 0.0
      %304 = vmatpush1.msra.mxu0 0.0
      %305 = vmatprep.subr.mxu0 0.0
      %306 = vmatpush1.msra.mxu0 0.0
      %307 = vmatprep.subr.mxu0 0.0
      %308 = vmatpush1.msra.mxu0 0.0
      %309 = vmatprep.subr.mxu0 0.0
      %310 = vmatpush1.msra.mxu0 0.0
      %311 = vmatprep.subr.mxu0 0.0
      %312 = vmatpush1.msra.mxu0 0.0
      %313 = vmatprep.subr.mxu0 0.0
      %314 = vmatpush1.msra.mxu0 0.0
      %315 = vmatprep.subr.mxu0 0.0
      %316 = vmatpush1.msra.mxu0 0.0
      %317 = vmatprep.subr.mxu0 0.0
      %318 = vmatpush1.msra.mxu0 0.0
      %319 = vmatprep.subr.mxu0 0.0
      %320 = vmatpush1.msra.mxu0 0.0
      %321 = vmatprep.subr.mxu0 0.0
      %322 = vmatpush1.msra.mxu0 0.0
      %323 = vmatprep.subr.mxu0 0.0
      %324 = vmatpush1.msra.mxu0 0.0
      %325 = vmatprep.subr.mxu0 0.0
      %326 = vmatpush1.msra.mxu0 0.0
      %327 = vmatprep.subr.mxu0 0.0
      %328 = vmatpush1.msra.mxu0 0.0
      %329 = vmatprep.subr.mxu0 0.0
      %330 = vmatpush1.msra.mxu0 0.0
      %331 = vmatprep.subr.mxu0 0.0
      %332 = vmatpush1.msra.mxu0 0.0
      %333 = vmatprep.subr.mxu0 0.0
      %334 = vmatpush1.msra.mxu0 0.0
      %335 = vmatprep.subr.mxu0 0.0
      %336 = vmatpush1.msra.mxu0 0.0
      %337 = vmatprep.subr.mxu0 0.0
      %338 = vmatpush1.msra.mxu0 0.0
      %339 = vmatprep.subr.mxu0 0.0
      %340 = vmatpush1.msra.mxu0 0.0
      %341 = vmatprep.subr.mxu0 0.0
      %342 = vmatpush1.msra.mxu0 0.0
      %343 = vmatprep.subr.mxu0 0.0
      %344 = vmatpush1.msra.mxu0 0.0
      %345 = vmatprep.subr.mxu0 0.0
      %346 = vmatpush1.msra.mxu0 0.0
      %347 = vmatprep.subr.mxu0 0.0
      %348 = vmatpush1.msra.mxu0 0.0
      %349 = vmatprep.subr.mxu0 0.0
      %350 = vmatpush1.msra.mxu0 0.0
      %351 = vmatprep.subr.mxu0 0.0
      %352 = vmatpush1.msra.mxu0 0.0
      %353 = vmatprep.subr.mxu0 0.0
      %354 = vmatpush1.msra.mxu0 0.0
      %355 = vmatprep.subr.mxu0 0.0
      %356 = vmatpush1.msra.mxu0 0.0
      %357 = vmatprep.subr.mxu0 0.0
      %358 = vmatpush1.msra.mxu0 0.0
      %359 = vmatprep.mubr.f32.mxu0 0.0
      %360 = vmatmul.mubr.f32.gmra.mrb[0].mxu0 %v290
      %v361 = vpop.f32.mrb[0].mxu0
      %v362 = vadd.f32 0.0, %v361
      %v363 = vpop.f32.mrb[0].mxu0
      %v364 = vadd.f32 0.0, %v363
      %365 = vmatprep.mubr.f32.mxu0 0.0
      %366 = vmatmul.mubr.f32.gmra.mrb[0].mxu0 %v293
      %v367 = vpop.f32.mrb[0].mxu0
      %v368 = vadd.f32 0.0, %v367
      %v369 = vpop.f32.mrb[0].mxu0
      %v370 = vadd.f32 0.0, %v369
      %371 = vdwg.mxu0
      %v373 = vsel %vm288, %v284, 0
      %v376 = vsel %vm288, %v285, 0
      %378 = vmatprep.subr.mxu0 %v241
      %379 = vmatpush1.msra.mxu0 %v240
      %380 = vmatprep.subr.mxu0 0.0
      %381 = vmatpush1.msra.mxu0 0.0
      %382 = vmatprep.subr.mxu0 0.0
      %383 = vmatpush1.msra.mxu0 0.0
      %384 = vmatprep.subr.mxu0 0.0
      %385 = vmatpush1.msra.mxu0 0.0
      %386 = vmatprep.subr.mxu0 0.0
      %387 = vmatpush1.msra.mxu0 0.0
      %388 = vmatprep.subr.mxu0 0.0
      %389 = vmatpush1.msra.mxu0 0.0
      %390 = vmatprep.subr.mxu0 0.0
      %391 = vmatpush1.msra.mxu0 0.0
      %392 = vmatprep.subr.mxu0 0.0
      %393 = vmatpush1.msra.mxu0 0.0
      %394 = vmatprep.subr.mxu0 0.0
      %395 = vmatpush1.msra.mxu0 0.0
      %396 = vmatprep.subr.mxu0 0.0
      %397 = vmatpush1.msra.mxu0 0.0
      %398 = vmatprep.subr.mxu0 0.0
      %399 = vmatpush1.msra.mxu0 0.0
      %400 = vmatprep.subr.mxu0 0.0
      %401 = vmatpush1.msra.mxu0 0.0
      %402 = vmatprep.subr.mxu0 0.0
      %403 = vmatpush1.msra.mxu0 0.0
      %404 = vmatprep.subr.mxu0 0.0
      %405 = vmatpush1.msra.mxu0 0.0
      %406 = vmatprep.subr.mxu0 0.0
      %407 = vmatpush1.msra.mxu0 0.0
      %408 = vmatprep.subr.mxu0 0.0
      %409 = vmatpush1.msra.mxu0 0.0
      %410 = vmatprep.subr.mxu0 0.0
      %411 = vmatpush1.msra.mxu0 0.0
      %412 = vmatprep.subr.mxu0 0.0
      %413 = vmatpush1.msra.mxu0 0.0
      %414 = vmatprep.subr.mxu0 0.0
      %415 = vmatpush1.msra.mxu0 0.0
      %416 = vmatprep.subr.mxu0 0.0
      %417 = vmatpush1.msra.mxu0 0.0
      %418 = vmatprep.subr.mxu0 0.0
      %419 = vmatpush1.msra.mxu0 0.0
      %420 = vmatprep.subr.mxu0 0.0
      %421 = vmatpush1.msra.mxu0 0.0
      %422 = vmatprep.subr.mxu0 0.0
      %423 = vmatpush1.msra.mxu0 0.0
      %424 = vmatprep.subr.mxu0 0.0
      %425 = vmatpush1.msra.mxu0 0.0
      %426 = vmatprep.subr.mxu0 0.0
      %427 = vmatpush1.msra.mxu0 0.0
      %428 = vmatprep.subr.mxu0 0.0
      %429 = vmatpush1.msra.mxu0 0.0
      %430 = vmatprep.subr.mxu0 0.0
      %431 = vmatpush1.msra.mxu0 0.0
      %432 = vmatprep.subr.mxu0 0.0
      %433 = vmatpush1.msra.mxu0 0.0
      %434 = vmatprep.subr.mxu0 0.0
      %435 = vmatpush1.msra.mxu0 0.0
      %436 = vmatprep.subr.mxu0 0.0
      %437 = vmatpush1.msra.mxu0 0.0
      %438 = vmatprep.subr.mxu0 0.0
      %439 = vmatpush1.msra.mxu0 0.0
      %440 = vmatprep.subr.mxu0 0.0
      %441 = vmatpush1.msra.mxu0 0.0
      %442 = vmatprep.mubr.f32.mxu0 0.0
      %443 = vmatmul.mubr.f32.gmra.mrb[0].mxu0 %v373
      %v444 = vpop.f32.mrb[0].mxu0
      %v445 = vadd.f32 %v362, %v444
      %v446 = vpop.f32.mrb[0].mxu0
      %v447 = vadd.f32 %v364, %v446
      %448 = vmatprep.mubr.f32.mxu0 0.0
      %449 = vmatmul.mubr.f32.gmra.mrb[0].mxu0 %v376
      %v450 = vpop.f32.mrb[0].mxu0
      %v451 = vadd.f32 %v368, %v450
      %v452 = vpop.f32.mrb[0].mxu0
      %v453 = vadd.f32 %v370, %v452
      %454 = vdwg.mxu0
      %p455 = scmp.eq.s32.totalorder %s21, 0
      // Predicated region
      $region33: #{causal_trans_conv_block.2} parent=31 // pred_check
        %p456 = pneg %p455
      $region34: #{causal_trans_conv_block.2} parent=31 // pred_check_branch
        %458 = sbr.rel (%p456) target = $region36
      $region35: #{causal_trans_conv_block.2} parent=31 // pred_region
        %459 = vst.msk [vmem:[%s233] sm:$0xff] %vm248, 0.0
        %vm460 = vcmask 3072
        %461 = vst.msk [vmem:[%s233 + $0x8] sm:$0xf] %vm460, 0.0
        %462 = vst.msk [vmem:[%s238] sm:$0xff] %vm248, 0.0
        %463 = vst.msk [vmem:[%s238 + $0x8] sm:$0xf] %vm460, 0.0
      $region36: #{causal_trans_conv_block.2} parent=31 // pred_fallthru
        _
      %v464 = vld [vmem:[%s233] sm:$0xff]
      %v465 = vld [vmem:[%s233 + $0x8] sm:$0xf]
      %v466 = vsel %vm288, %v447, 0.0
      %v467 = vadd.f32 %v445, %v466
      %468 = vadd.xlane.f32.xlu0 %v467
      %v469 = vpop.xlane.xlu0 %468
      %vm470 = vcmask 1043456
      %v471 = vsel %vm470, %v451, 0.0
      %vm472 = vcmask 60416
      %v473 = vsel %vm472, %v453, 0.0
      %v474 = vadd.f32 %v471, %v473
      %475 = vadd.xlane.f32.xlu0 %v474
      %v476 = vpop.xlane.xlu0 %475
      %v477 = vadd.f32 %v464, %v469
      %v478 = vadd.f32 %v465, %v476
      %479 = vst.msk [vmem:[%s233] sm:$0xff] %vm248, %v477
      %vm480 = vcmask 3072
      %481 = vst.msk [vmem:[%s233 + $0x8] sm:$0xf] %vm480, %v478
      %v482 = vld [vmem:[%s238] sm:$0xff]
      %v483 = vld [vmem:[%s238 + $0x8] sm:$0xf]
      %v484 = vmul.f32 %v445, %v445
      %v485 = vmul.f32 %v447, %v447
      %v486 = vmul.f32 %v451, %v451
      %v487 = vmul.f32 %v453, %v453
      %v488 = vsel %vm288, %v485, 0.0
      %v489 = vadd.f32 %v484, %v488
      %490 = vadd.xlane.f32.xlu0 %v489
      %v491 = vpop.xlane.xlu0 %490
      %v492 = vsel %vm470, %v486, 0.0
      %v493 = vsel %vm472, %v487, 0.0
      %v494 = vadd.f32 %v492, %v493
      %495 = vadd.xlane.f32.xlu0 %v494
      %v496 = vpop.xlane.xlu0 %495
      %v497 = vadd.f32 %v482, %v491
      %v498 = vadd.f32 %v483, %v496
      %499 = vst.msk [vmem:[%s238] sm:$0xff] %vm248, %v497
      %500 = vst.msk [vmem:[%s238 + $0x8] sm:$0xf] %vm480, %v498
      %p501 = scmp.lt.s32.totalorder %s20, 1
      %s502 = scalar_select %p501, %s20, 1
      %s503 = smul.addr %s502, 2
      %s504 = smul.addr %s503, 8
      %s505 = scalar_lea.vmem %s3, %s504
      %p506 = scmp.lt.s32.totalorder %s20, 1
      %s507 = scalar_select %p506, %s20, 1
      %s508 = smul.addr %s507, 2
      %s509 = smul.addr %s508, 8
      %s510 = scalar_lea.vmem %s4, %s509
      // Predicated region
      $region37: #{causal_trans_conv_block.2} parent=31 // pred_check
        %p511 = pneg %p116
      $region38: #{causal_trans_conv_block.2} parent=31 // pred_check_branch
        %513 = sbr.rel (%p511) target = $region40
      $region39: #{causal_trans_conv_block.2} parent=31 // pred_region
        _
      $region40: #{causal_trans_conv_block.2} parent=31 // pred_fallthru
        _
      // Predicated region
      $region41: #{causal_trans_conv_block.2} parent=31 // pred_check
        %p514 = pneg %p142
      $region42: #{causal_trans_conv_block.2} parent=31 // pred_check_branch
        %516 = sbr.rel (%p514) target = $region44
      $region43: #{causal_trans_conv_block.2} parent=31 // pred_region
        _
      $region44: #{causal_trans_conv_block.2} parent=31 // pred_fallthru
        _
    $region32: #{causal_trans_conv_block.2} parent=5 // pred_fallthru
      _
    %p517 = scmp.le.s32.totalorder 2, %s11
    // Predicated region
    $region45: #{causal_trans_conv_block.2} parent=5 // pred_check
      %p518 = pneg %p517
    $region46: #{causal_trans_conv_block.2} parent=5 // pred_check_branch
      %520 = sbr.rel (%p518) target = $region48
    $region47: #{causal_trans_conv_block.2} parent=5 // pred_region
      %s521 = ssub.s32 %s11, 2
      // Predicated region
      $region49: #{causal_trans_conv_block.2} parent=47 // pred_check
        %p522 = pneg %p122
      $region50: #{causal_trans_conv_block.2} parent=47 // pred_check_branch
        %524 = sbr.rel (%p522) target = $region52
      $region51: #{causal_trans_conv_block.2} parent=47 // pred_region
        %p525 = scmp.lt.s32.totalorder %s22, 1
        %s526 = scalar_select %p525, %s22, 1
        %s527 = smul.addr %s526, 2
        %s528 = smul.addr %s527, 8
        %s529 = scalar_lea.vmem %s3, %s528
      $region52: #{causal_trans_conv_block.2} parent=47 // pred_fallthru
        _
      // Predicated region
      $region53: #{causal_trans_conv_block.2} parent=47 // pred_check
        %p530 = pneg %p148
      $region54: #{causal_trans_conv_block.2} parent=47 // pred_check_branch
        %532 = sbr.rel (%p530) target = $region56
      $region55: #{causal_trans_conv_block.2} parent=47 // pred_region
        %p533 = scmp.lt.s32.totalorder %s22, 1
        %s534 = scalar_select %p533, %s22, 1
        %s535 = smul.addr %s534, 2
        %s536 = smul.addr %s535, 8
        %s537 = scalar_lea.vmem %s4, %s536
      $region56: #{causal_trans_conv_block.2} parent=47 // pred_fallthru
        _
    $region48: #{causal_trans_conv_block.2} parent=5 // pred_fallthru
      _
  $region6: #{causal_trans_conv_block.2} parent=0 // loop_footer
    %s15 = sadd.s32 1, %s11
  $region7: #{causal_trans_conv_block.2} parent=0 // loop_footer_branch
    %10 = sbr.rel target = $region3
  $region8: #{causal_trans_conv_block.2} parent=0 // loop_exit
    _

// kernel: causal_trans_conv_block.3
$region0: #{causal_trans_conv_block.3}
  #allocation0 [shape = 'u32[]', space=smem, size = 0x4, offset = 0x4, fixed_abs, tag = 'smem constant byte address 0x4 - core index']
  #allocation1 [shape = 'u32[144,128]{1,0:T(1,128)}', space=vmem, size = 0x12000, scoped, tag = 'internal scratch']
  %s0 = inlined_call_operand.vmem [shape: bf16[2,8,136], index: 0, kind: input, shape index: {}]
  %s1 = inlined_call_operand.vmem [shape: f32[12,8], index: 1, kind: input, shape index: {}]
  %s2 = inlined_call_operand.vmem [shape: f32[12,8], index: 2, kind: input, shape index: {}]
  %s3 = inlined_call_operand.vmem [shape: f32[12,1], index: 3, kind: input, shape index: {}]
  %s4 = inlined_call_operand.vmem [shape: f32[12,1], index: 4, kind: input, shape index: {}]
  %s5 = inlined_call_operand.vmem [shape: f32[2,12,136], index: 5, kind: output, shape index: {}]
  %s6 = sld [smem:[#allocation0]]
  $region53: #{causal_trans_conv_block.3} parent=0
    _
  %s8 = ssub.s32 1, %s6
  %s9 = scalar_select 0, %s8, %s6
  loop: start=0, step=1, limit=4
  $region2: #{causal_trans_conv_block.3} parent=0 // loop_pre_header
    _
  $region3: #{causal_trans_conv_block.3} parent=0 // loop_header
    %s11 = sphi 0, %s15
    %p12 = scmp.ge.s32.totalorder %s11, 4
    %s18 = sphi 0, %s30
    %s19 = sphi 0, %s26
    %s20 = sphi 0, %s18
    %s21 = sphi 0, %s19
    %s22 = sphi 0, %s20
    %s23 = sphi 0, %s21
    %s35 = sphi 0, %s37
    %s38 = sphi 0, %s35
    %s39 = sphi 0, %s38
    %s55 = sphi 0, %s39
    %s59 = sphi 0, %s59
    %s61 = sphi 0, %s59
    %s62 = sphi 0, %s61
    %s76 = sphi 0, %s62
    %s80 = sphi 0, %s80
    %s82 = sphi 0, %s80
    %s83 = sphi 0, %s82
    %s97 = sphi 0, %s83
    %s101 = sphi 0, %s101
    %s103 = sphi 0, %s101
    %s104 = sphi 0, %s103
    %s118 = sphi 0, %s104
    %s122 = sphi 0, %s122
    %s124 = sphi 0, %s122
    %s125 = sphi 0, %s124
    %s139 = sphi 0, %s125
    %s147 = sphi 0, %s149
    %s150 = sphi 0, %s147
    %s151 = sphi 0, %s150
    %s167 = sphi 0, %s151
  $region4: #{causal_trans_conv_block.3} parent=0 // loop_header_branch
    %14 = sbr.rel (%p12) target = $region8
  $region5: #{causal_trans_conv_block.3} parent=0 // loop_body
    %s16 = ssub.s32 %s11, 1
    %s17 = ssub.s32 %s11, 2
    %s24 = sadd.s32 1, %s19
    %p25 = scmp.ge.s32.totalorder %s24, 1
    %s26 = scalar_select %p25, 0, %s24
    %s27 = sadd.s32 1, %s18
    %s28 = scalar_select %p25, %s27, %s18
    %p29 = scmp.ge.s32.totalorder %s28, 2
    %s30 = scalar_select %p29, 0, %s28
    %s31 = ssub.s32 %s18, %s30
    %s32 = ssub.s32 %s19, %s26
    %s33 = sor.u32 %s31, %s32
    %p34 = scmp.eq.s32.totalorder %s33, 0
    %s36 = sadd.s32 %s35, 1
    %s37 = scalar_select %p34, %s35, %s36
    %p40 = pneg %p34
    %p41 = scmp.eq.s32.totalorder %s11, 1
    %p42 = por %p40, %p41
    %p43 = scmp.ne.s32.totalorder %s35, %s38
    %p44 = scmp.eq.s32.totalorder %s11, 0
    %p45 = por %p43, %p44
    %p46 = scmp.ne.s32.totalorder %s35, %s38
    %p47 = scmp.eq.s32.totalorder %s16, 1
    %p48 = por %p46, %p47
    %p49 = scmp.ne.s32.totalorder %s38, %s39
    %p50 = scmp.eq.s32.totalorder %s16, 0
    %p51 = por %p49, %p50
    %p52 = scmp.ne.s32.totalorder %s38, %s39
    %p53 = scmp.eq.s32.totalorder %s17, 1
    %p54 = por %p52, %p53
    %p56 = scmp.ne.s32.totalorder %s39, %s55
    %p57 = scmp.eq.s32.totalorder %s17, 0
    %p58 = por %p56, %p57
    %s60 = sadd.s32 %s59, 1
    %p63 = scmp.eq.s32.totalorder %s11, 1
    %p64 = scmp.ne.s32.totalorder %s59, %s61
    %p65 = scmp.eq.s32.totalorder %s11, 0
    %p66 = por %p64, %p65
    %p67 = scmp.ne.s32.totalorder %s59, %s61
    %p68 = scmp.eq.s32.totalorder %s16, 1
    %p69 = por %p67, %p68
    %p70 = scmp.ne.s32.totalorder %s61, %s62
    %p71 = scmp.eq.s32.totalorder %s16, 0
    %p72 = por %p70, %p71
    %p73 = scmp.ne.s32.totalorder %s61, %s62
    %p74 = scmp.eq.s32.totalorder %s17, 1
    %p75 = por %p73, %p74
    %p77 = scmp.ne.s32.totalorder %s62, %s76
    %p78 = scmp.eq.s32.totalorder %s17, 0
    %p79 = por %p77, %p78
    %s81 = sadd.s32 %s80, 1
    %p84 = scmp.eq.s32.totalorder %s11, 1
    %p85 = scmp.ne.s32.totalorder %s80, %s82
    %p86 = scmp.eq.s32.totalorder %s11, 0
    %p87 = por %p85, %p86
    %p88 = scmp.ne.s32.totalorder %s80, %s82
    %p89 = scmp.eq.s32.totalorder %s16, 1
    %p90 = por %p88, %p89
    %p91 = scmp.ne.s32.totalorder %s82, %s83
    %p92 = scmp.eq.s32.totalorder %s16, 0
    %p93 = por %p91, %p92
    %p94 = scmp.ne.s32.totalorder %s82, %s83
    %p95 = scmp.eq.s32.totalorder %s17, 1
    %p96 = por %p94, %p95
    %p98 = scmp.ne.s32.totalorder %s83, %s97
    %p99 = scmp.eq.s32.totalorder %s17, 0
    %p100 = por %p98, %p99
    %s102 = sadd.s32 %s101, 1
    %p105 = scmp.eq.s32.totalorder %s11, 1
    %p106 = scmp.ne.s32.totalorder %s101, %s103
    %p107 = scmp.eq.s32.totalorder %s11, 0
    %p108 = por %p106, %p107
    %p109 = scmp.ne.s32.totalorder %s101, %s103
    %p110 = scmp.eq.s32.totalorder %s16, 1
    %p111 = por %p109, %p110
    %p112 = scmp.ne.s32.totalorder %s103, %s104
    %p113 = scmp.eq.s32.totalorder %s16, 0
    %p114 = por %p112, %p113
    %p115 = scmp.ne.s32.totalorder %s103, %s104
    %p116 = scmp.eq.s32.totalorder %s17, 1
    %p117 = por %p115, %p116
    %p119 = scmp.ne.s32.totalorder %s104, %s118
    %p120 = scmp.eq.s32.totalorder %s17, 0
    %p121 = por %p119, %p120
    %s123 = sadd.s32 %s122, 1
    %p126 = scmp.eq.s32.totalorder %s11, 1
    %p127 = scmp.ne.s32.totalorder %s122, %s124
    %p128 = scmp.eq.s32.totalorder %s11, 0
    %p129 = por %p127, %p128
    %p130 = scmp.ne.s32.totalorder %s122, %s124
    %p131 = scmp.eq.s32.totalorder %s16, 1
    %p132 = por %p130, %p131
    %p133 = scmp.ne.s32.totalorder %s124, %s125
    %p134 = scmp.eq.s32.totalorder %s16, 0
    %p135 = por %p133, %p134
    %p136 = scmp.ne.s32.totalorder %s124, %s125
    %p137 = scmp.eq.s32.totalorder %s17, 1
    %p138 = por %p136, %p137
    %p140 = scmp.ne.s32.totalorder %s125, %s139
    %p141 = scmp.eq.s32.totalorder %s17, 0
    %p142 = por %p140, %p141
    %s143 = ssub.s32 %s18, %s30
    %s144 = ssub.s32 %s19, %s26
    %s145 = sor.u32 %s143, %s144
    %p146 = scmp.eq.s32.totalorder %s145, 0
    %s148 = sadd.s32 %s147, 1
    %s149 = scalar_select %p146, %s147, %s148
    %p152 = pneg %p146
    %p153 = scmp.eq.s32.totalorder %s11, 1
    %p154 = por %p152, %p153
    %p155 = scmp.ne.s32.totalorder %s147, %s150
    %p156 = scmp.eq.s32.totalorder %s11, 0
    %p157 = por %p155, %p156
    %p158 = scmp.ne.s32.totalorder %s147, %s150
    %p159 = scmp.eq.s32.totalorder %s16, 1
    %p160 = por %p158, %p159
    %p161 = scmp.ne.s32.totalorder %s150, %s151
    %p162 = scmp.eq.s32.totalorder %s16, 0
    %p163 = por %p161, %p162
    %p164 = scmp.ne.s32.totalorder %s150, %s151
    %p165 = scmp.eq.s32.totalorder %s17, 1
    %p166 = por %p164, %p165
    %p168 = scmp.ne.s32.totalorder %s151, %s167
    %p169 = scmp.eq.s32.totalorder %s17, 0
    %p170 = por %p168, %p169
    %p171 = scmp.le.s32.totalorder 1, %s11
    %p172 = scmp.lt.s32.totalorder %s11, 3
    %p173 = pnand %p171, %p172
    %p174 = pneg %p173
    // Predicated region
    $region9: #{causal_trans_conv_block.3} parent=5 // pred_check
      _
    $region10: #{causal_trans_conv_block.3} parent=5 // pred_check_branch
      %176 = sbr.rel (%p173) target = $region12
    $region11: #{causal_trans_conv_block.3} parent=5 // pred_region
      %s177 = ssub.s32 %s11, 1
      // Predicated region
      $region13: #{causal_trans_conv_block.3} parent=11 // pred_check
        %p178 = pneg %p72
      $region14: #{causal_trans_conv_block.3} parent=11 // pred_check_branch
        %180 = sbr.rel (%p178) target = $region16
      $region15: #{causal_trans_conv_block.3} parent=11 // pred_region
        _
      $region16: #{causal_trans_conv_block.3} parent=11 // pred_fallthru
        _
      // Predicated region
      $region17: #{causal_trans_conv_block.3} parent=11 // pred_check
        %p181 = pneg %p93
      $region18: #{causal_trans_conv_block.3} parent=11 // pred_check_branch
        %183 = sbr.rel (%p181) target = $region20
      $region19: #{causal_trans_conv_block.3} parent=11 // pred_region
        _
      $region20: #{causal_trans_conv_block.3} parent=11 // pred_fallthru
        _
      // Predicated region
      $region21: #{causal_trans_conv_block.3} parent=11 // pred_check
        %p184 = pneg %p114
      $region22: #{causal_trans_conv_block.3} parent=11 // pred_check_branch
        %186 = sbr.rel (%p184) target = $region24
      $region23: #{causal_trans_conv_block.3} parent=11 // pred_region
        _
      $region24: #{causal_trans_conv_block.3} parent=11 // pred_fallthru
        _
      // Predicated region
      $region25: #{causal_trans_conv_block.3} parent=11 // pred_check
        %p187 = pneg %p135
      $region26: #{causal_trans_conv_block.3} parent=11 // pred_check_branch
        %189 = sbr.rel (%p187) target = $region28
      $region27: #{causal_trans_conv_block.3} parent=11 // pred_region
        _
      $region28: #{causal_trans_conv_block.3} parent=11 // pred_fallthru
        _
    $region12: #{causal_trans_conv_block.3} parent=5 // pred_fallthru
      _
    %p190 = scmp.lt.s32.totalorder %s11, 2
    // Predicated region
    $region29: #{causal_trans_conv_block.3} parent=5 // pred_check
      %p191 = pneg %p190
    $region30: #{causal_trans_conv_block.3} parent=5 // pred_check_branch
      %193 = sbr.rel (%p191) target = $region32
    $region31: #{causal_trans_conv_block.3} parent=5 // pred_region
      // Predicated region
      $region33: #{causal_trans_conv_block.3} parent=31 // pred_check
        %p194 = pneg %p45
      $region34: #{causal_trans_conv_block.3} parent=31 // pred_check_branch
        %196 = sbr.rel (%p194) target = $region36
      $region35: #{causal_trans_conv_block.3} parent=31 // pred_region
        %s197 = smul.u32 2, %s19
        %p198 = scmp.lt.s32.totalorder %s18, 1
        %s199 = scalar_select %p198, %s18, 1
        %p200 = scmp.lt.s32.totalorder %s197, 1
        %s201 = scalar_select %p200, %s197, 1
        %s202 = smul.addr %s199, 2
        %s203 = sadd.s32 %s201, %s202
        %s204 = smul.addr %s203, 4
        %s205 = scalar_lea.vmem %s0, %s204
        %s206 = smul.u32 2, %s19
      $region36: #{causal_trans_conv_block.3} parent=31 // pred_fallthru
        _
    $region32: #{causal_trans_conv_block.3} parent=5 // pred_fallthru
      _
    %p207 = scmp.le.s32.totalorder 1, %s11
    %p208 = scmp.lt.s32.totalorder %s11, 3
    %p209 = pnand %p207, %p208
    %p210 = pneg %p209
    // Predicated region
    $region37: #{causal_trans_conv_block.3} parent=5 // pred_check
      _
    $region38: #{causal_trans_conv_block.3} parent=5 // pred_check_branch
      %212 = sbr.rel (%p209) target = $region40
    $region39: #{causal_trans_conv_block.3} parent=5 // pred_region
      %s213 = ssub.s32 %s11, 1
      %s214 = smul.u32 2, %s21
      %p215 = scmp.lt.s32.totalorder %s20, 1
      %s216 = scalar_select %p215, %s20, 1
      %p217 = scmp.lt.s32.totalorder %s214, 1
      %s218 = scalar_select %p217, %s214, 1
      %s219 = smul.addr %s216, 2
      %s220 = sadd.s32 %s218, %s219
      %s221 = smul.addr %s220, 4
      %s222 = scalar_lea.vmem %s0, %s221
      %p223 = pneg %p51
      %p224 = pneg %p48
      %p225 = pneg %p72
      %p226 = pneg %p69
      %p227 = pneg %p93
      %p228 = pneg %p90
      %p229 = pneg %p114
      %p230 = pneg %p111
      %p231 = pneg %p135
      %p232 = pneg %p132
      %p233 = pneg %p163
      %p234 = pneg %p160
      %s235 = smul.u32 2, %s21
      %p236 = scmp.lt.s32.totalorder %s20, 1
      %s237 = scalar_select %p236, %s20, 1
      %p238 = scmp.lt.s32.totalorder %s235, 1
      %s239 = scalar_select %p238, %s235, 1
      %s240 = smul.addr %s237, 4
      %s241 = sadd.s32 %s239, %s240
      %s242 = smul.addr %s241, 8
      %s243 = scalar_lea.vmem %s5, %s242
      %s244 = smul.u32 2, %s21
      %p245 = scmp.lt.s32.totalorder %s20, 1
      %s246 = scalar_select %p245, %s20, 1
      %p247 = scmp.lt.s32.totalorder %s244, 1
      %s248 = scalar_select %p247, %s244, 1
      %s249 = smul.addr %s246, 2
      %s250 = sadd.s32 %s248, %s249
      %s251 = smul.addr %s250, 4
      %s252 = scalar_lea.vmem %s0, %s251
      %s253 = smul.u32 2, %s21
      %s254 = smul.u32 2, %s21
      %p255 = scmp.lt.s32.totalorder %s20, 1
      %s256 = scalar_select %p255, %s20, 1
      %p257 = scmp.lt.s32.totalorder %s254, 1
      %s258 = scalar_select %p257, %s254, 1
      %s259 = smul.addr %s256, 4
      %s260 = sadd.s32 %s258, %s259
      %s261 = smul.addr %s260, 8
      %s262 = scalar_lea.vmem %s5, %s261
      %s263 = smul.u32 2, %s21
      %v264 = vld [vmem:[%s252] sm:$0xff]
      %v265 = vunpack.c.l.bf16 %v264
      %v266 = vunpack.c.h.bf16 %v264
      %269 = vrot.lane.b32.xlu0 %v265, 1
      %v270 = vpop.permute.xlu0 %269
      %271 = vrot.lane.b32.xlu0 %v266, 1
      %v272 = vpop.permute.xlu0 %271
      %vm273 = vcmask 7168
      %v274 = vsel %vm273, %v270, %v272
      %v277 = vsel %vm273, 0.0, %v270
      %v278 = vlaneseq
      %v279 = vand.u32 %v278, 127
      %v280 = vadd.s32 %v279, 128
      %vm281 = vcmp.lt.s32.totalorder %v279, 0
      %v282 = vsub.s32 0, %v279
      %v283 = vsel %vm281, %v282, %v279
      %v284 = vshrl.u32 %v283, 3
      %v285 = vand.u32 %v283, 7
      %v286 = vsub.s32 0, %v285
      %v287 = vsel %vm281, %v286, %v285
      %vm288 = vcmp.lt.s32.totalorder %v280, 0
      %v289 = vsub.s32 0, %v280
      %v290 = vsel %vm288, %v289, %v280
      %v291 = vshrl.u32 %v290, 3
      %v292 = vand.u32 %v290, 7
      %v293 = vsub.s32 0, %v292
      %v294 = vsel %vm288, %v293, %v292
      %vm295 = vcmp.ne.s32.totalorder %v287, 0
      %vm296 = vcmp.ne.s32.totalorder %v294, 0
      %vm297 = vcmp.lt.s32.totalorder %v287, 0
      %vm298 = vcmp.lt.s32.totalorder %v294, 0
      %vm299 = vmand %vm297, %vm295
      %vm300 = vmand %vm298, %vm296
      %v301 = vadd.s32 %v287, 8
      %v302 = vadd.s32 %v294, 8
      %v303 = vsel %vm299, %v301, %v287
      %v304 = vsel %vm300, %v302, %v294
      %vm305 = vcmp.ne.s32.totalorder %v303, 0
      %vm306 = vcmp.ne.s32.totalorder %v304, 0
      %v307 = vsel %vm305, %v277, 0.0
      %v308 = vsel %vm306, %v274, 0.0
      %v309 = vld [vmem:[%s1] sm:$0xff]
      %v310 = vld [vmem:[%s1 + $0x8] sm:$0xf]
      %v311 = vld [vmem:[%s2] sm:$0xff]
      %v312 = vld [vmem:[%s2 + $0x8] sm:$0xf]
      %vm313 = vcmask 64512
      %v315 = vsel %vm313, %v311, 0
      %v318 = vsel %vm313, %v312, 0
      %320 = vmatprep.subr.mxu0 %v308
      %321 = vmatpush1.msra.mxu0 %v307
      %322 = vmatprep.subr.mxu0 0.0
      %323 = vmatpush1.msra.mxu0 0.0
      %324 = vmatprep.subr.mxu0 0.0
      %325 = vmatpush1.msra.mxu0 0.0
      %326 = vmatprep.subr.mxu0 0.0
      %327 = vmatpush1.msra.mxu0 0.0
      %328 = vmatprep.subr.mxu0 0.0
      %329 = vmatpush1.msra.mxu0 0.0
      %330 = vmatprep.subr.mxu0 0.0
      %331 = vmatpush1.msra.mxu0 0.0
      %332 = vmatprep.subr.mxu0 0.0
      %333 = vmatpush1.msra.mxu0 0.0
      %334 = vmatprep.subr.mxu0 0.0
      %335 = vmatpush1.msra.mxu0 0.0
      %336 = vmatprep.subr.mxu0 0.0
      %337 = vmatpush1.msra.mxu0 0.0
      %338 = vmatprep.subr.mxu0 0.0
      %339 = vmatpush1.msra.mxu0 0.0
      %340 = vmatprep.subr.mxu0 0.0
      %341 = vmatpush1.msra.mxu0 0.0
      %342 = vmatprep.subr.mxu0 0.0
      %343 = vmatpush1.msra.mxu0 0.0
      %344 = vmatprep.subr.mxu0 0.0
      %345 = vmatpush1.msra.mxu0 0.0
      %346 = vmatprep.subr.mxu0 0.0
      %347 = vmatpush1.msra.mxu0 0.0
      %348 = vmatprep.subr.mxu0 0.0
      %349 = vmatpush1.msra.mxu0 0.0
      %350 = vmatprep.subr.mxu0 0.0
      %351 = vmatpush1.msra.mxu0 0.0
      %352 = vmatprep.subr.mxu0 0.0
      %353 = vmatpush1.msra.mxu0 0.0
      %354 = vmatprep.subr.mxu0 0.0
      %355 = vmatpush1.msra.mxu0 0.0
      %356 = vmatprep.subr.mxu0 0.0
      %357 = vmatpush1.msra.mxu0 0.0
      %358 = vmatprep.subr.mxu0 0.0
      %359 = vmatpush1.msra.mxu0 0.0
      %360 = vmatprep.subr.mxu0 0.0
      %361 = vmatpush1.msra.mxu0 0.0
      %362 = vmatprep.subr.mxu0 0.0
      %363 = vmatpush1.msra.mxu0 0.0
      %364 = vmatprep.subr.mxu0 0.0
      %365 = vmatpush1.msra.mxu0 0.0
      %366 = vmatprep.subr.mxu0 0.0
      %367 = vmatpush1.msra.mxu0 0.0
      %368 = vmatprep.subr.mxu0 0.0
      %369 = vmatpush1.msra.mxu0 0.0
      %370 = vmatprep.subr.mxu0 0.0
      %371 = vmatpush1.msra.mxu0 0.0
      %372 = vmatprep.subr.mxu0 0.0
      %373 = vmatpush1.msra.mxu0 0.0
      %374 = vmatprep.subr.mxu0 0.0
      %375 = vmatpush1.msra.mxu0 0.0
      %376 = vmatprep.subr.mxu0 0.0
      %377 = vmatpush1.msra.mxu0 0.0
      %378 = vmatprep.subr.mxu0 0.0
      %379 = vmatpush1.msra.mxu0 0.0
      %380 = vmatprep.subr.mxu0 0.0
      %381 = vmatpush1.msra.mxu0 0.0
      %382 = vmatprep.subr.mxu0 0.0
      %383 = vmatpush1.msra.mxu0 0.0
      %384 = vmatprep.mubr.f32.mxu0 0.0
      %385 = vmatmul.mubr.f32.gmra.mrb[0].mxu0 %v315
      %v386 = vpop.f32.mrb[0].mxu0
      %v387 = vadd.f32 0.0, %v386
      %v388 = vpop.f32.mrb[0].mxu0
      %v389 = vadd.f32 0.0, %v388
      %390 = vmatprep.mubr.f32.mxu0 0.0
      %391 = vmatmul.mubr.f32.gmra.mrb[0].mxu0 %v318
      %v392 = vpop.f32.mrb[0].mxu0
      %v393 = vadd.f32 0.0, %v392
      %v394 = vpop.f32.mrb[0].mxu0
      %v395 = vadd.f32 0.0, %v394
      %396 = vdwg.mxu0
      %v398 = vsel %vm313, %v309, 0
      %v401 = vsel %vm313, %v310, 0
      %403 = vmatprep.subr.mxu0 %v266
      %404 = vmatpush1.msra.mxu0 %v265
      %405 = vmatprep.subr.mxu0 0.0
      %406 = vmatpush1.msra.mxu0 0.0
      %407 = vmatprep.subr.mxu0 0.0
      %408 = vmatpush1.msra.mxu0 0.0
      %409 = vmatprep.subr.mxu0 0.0
      %410 = vmatpush1.msra.mxu0 0.0
      %411 = vmatprep.subr.mxu0 0.0
      %412 = vmatpush1.msra.mxu0 0.0
      %413 = vmatprep.subr.mxu0 0.0
      %414 = vmatpush1.msra.mxu0 0.0
      %415 = vmatprep.subr.mxu0 0.0
      %416 = vmatpush1.msra.mxu0 0.0
      %417 = vmatprep.subr.mxu0 0.0
      %418 = vmatpush1.msra.mxu0 0.0
      %419 = vmatprep.subr.mxu0 0.0
      %420 = vmatpush1.msra.mxu0 0.0
      %421 = vmatprep.subr.mxu0 0.0
      %422 = vmatpush1.msra.mxu0 0.0
      %423 = vmatprep.subr.mxu0 0.0
      %424 = vmatpush1.msra.mxu0 0.0
      %425 = vmatprep.subr.mxu0 0.0
      %426 = vmatpush1.msra.mxu0 0.0
      %427 = vmatprep.subr.mxu0 0.0
      %428 = vmatpush1.msra.mxu0 0.0
      %429 = vmatprep.subr.mxu0 0.0
      %430 = vmatpush1.msra.mxu0 0.0
      %431 = vmatprep.subr.mxu0 0.0
      %432 = vmatpush1.msra.mxu0 0.0
      %433 = vmatprep.subr.mxu0 0.0
      %434 = vmatpush1.msra.mxu0 0.0
      %435 = vmatprep.subr.mxu0 0.0
      %436 = vmatpush1.msra.mxu0 0.0
      %437 = vmatprep.subr.mxu0 0.0
      %438 = vmatpush1.msra.mxu0 0.0
      %439 = vmatprep.subr.mxu0 0.0
      %440 = vmatpush1.msra.mxu0 0.0
      %441 = vmatprep.subr.mxu0 0.0
      %442 = vmatpush1.msra.mxu0 0.0
      %443 = vmatprep.subr.mxu0 0.0
      %444 = vmatpush1.msra.mxu0 0.0
      %445 = vmatprep.subr.mxu0 0.0
      %446 = vmatpush1.msra.mxu0 0.0
      %447 = vmatprep.subr.mxu0 0.0
      %448 = vmatpush1.msra.mxu0 0.0
      %449 = vmatprep.subr.mxu0 0.0
      %450 = vmatpush1.msra.mxu0 0.0
      %451 = vmatprep.subr.mxu0 0.0
      %452 = vmatpush1.msra.mxu0 0.0
      %453 = vmatprep.subr.mxu0 0.0
      %454 = vmatpush1.msra.mxu0 0.0
      %455 = vmatprep.subr.mxu0 0.0
      %456 = vmatpush1.msra.mxu0 0.0
      %457 = vmatprep.subr.mxu0 0.0
      %458 = vmatpush1.msra.mxu0 0.0
      %459 = vmatprep.subr.mxu0 0.0
      %460 = vmatpush1.msra.mxu0 0.0
      %461 = vmatprep.subr.mxu0 0.0
      %462 = vmatpush1.msra.mxu0 0.0
      %463 = vmatprep.subr.mxu0 0.0
      %464 = vmatpush1.msra.mxu0 0.0
      %465 = vmatprep.subr.mxu0 0.0
      %466 = vmatpush1.msra.mxu0 0.0
      %467 = vmatprep.mubr.f32.mxu0 0.0
      %468 = vmatmul.mubr.f32.gmra.mrb[0].mxu0 %v398
      %v469 = vpop.f32.mrb[0].mxu0
      %v470 = vadd.f32 %v387, %v469
      %v471 = vpop.f32.mrb[0].mxu0
      %v472 = vadd.f32 %v389, %v471
      %473 = vmatprep.mubr.f32.mxu0 0.0
      %474 = vmatmul.mubr.f32.gmra.mrb[0].mxu0 %v401
      %v475 = vpop.f32.mrb[0].mxu0
      %v476 = vadd.f32 %v393, %v475
      %v477 = vpop.f32.mrb[0].mxu0
      %v478 = vadd.f32 %v395, %v477
      %479 = vdwg.mxu0
      %v480 = vld [vmem:[%s3] sm:$0xff]
      %v481 = vld [vmem:[%s3 + $0x8] sm:$0xf]
      %483 = vset.pattern.permute.xlu0 0
      %484 = vperm.xlu0 %483, %v480
      %v485 = vpop.permute.xlu0 %484
      %488 = vset.pattern.permute.xlu0 0
      %489 = vperm.xlu0 %488, %v481
      %v490 = vpop.permute.xlu0 %489
      %v492 = vmul.f32 %v470, %v485
      %v493 = vmul.f32 %v472, %v485
      %v494 = vmul.f32 %v476, %v490
      %v495 = vmul.f32 %v478, %v490
      %v496 = vld [vmem:[%s4] sm:$0xff]
      %v497 = vld [vmem:[%s4 + $0x8] sm:$0xf]
      %499 = vset.pattern.permute.xlu0 0
      %500 = vperm.xlu0 %499, %v496
      %v501 = vpop.permute.xlu0 %500
      %504 = vset.pattern.permute.xlu0 0
      %505 = vperm.xlu0 %504, %v497
      %v506 = vpop.permute.xlu0 %505
      %v508 = vadd.f32 %v492, %v501
      %v509 = vadd.f32 %v493, %v501
      %v510 = vadd.f32 %v494, %v506
      %v511 = vadd.f32 %v495, %v506
      %vm512 = vcmp.gt.f32.partialorder %v508, 0.0
      %vm513 = vcmp.gt.f32.partialorder %v509, 0.0
      %vm514 = vcmp.gt.f32.partialorder %v510, 0.0
      %vm515 = vcmp.gt.f32.partialorder %v511, 0.0
      %v516 = vmin.f32 %v508, 0.0
      %v517 = vmin.f32 %v509, 0.0
      %v518 = vmin.f32 %v510, 0.0
      %v519 = vmin.f32 %v511, 0.0
      %v520 = vmul.f32 %v516, 1.442695
      %v521 = vpow.pop %v520
      %v522 = vmul.f32 %v517, 1.442695
      %v523 = vpow.pop %v522
      %v524 = vmul.f32 %v518, 1.442695
      %v525 = vpow.pop %v524
      %v526 = vmul.f32 %v519, 1.442695
      %v527 = vpow.pop %v526
      %v528 = vsub.f32 %v521, 1.0
      %v529 = vsub.f32 %v523, 1.0
      %v530 = vsub.f32 %v525, 1.0
      %v531 = vsub.f32 %v527, 1.0
      %v532 = vsel %vm512, %v508, %v528
      %v533 = vsel %vm513, %v509, %v529
      %v534 = vsel %vm514, %v510, %v530
      %v535 = vsel %vm515, %v511, %v531
      %536 = vst [vmem:[%s262] sm:$0xff] %v532
      %537 = vst.msk [vmem:[%s262 + $0x8] sm:$0xff] %vm313, %v533
      %538 = vst [vmem:[%s262 + $0x10] sm:$0xf] %v534
      %vm539 = vcmask 60416
      %540 = vst.msk [vmem:[%s262 + $0x18] sm:$0xf] %vm539, %v535
      %s541 = smul.u32 2, %s21
      %p542 = scmp.lt.s32.totalorder %s20, 1
      %s543 = scalar_select %p542, %s20, 1
      %p544 = scmp.lt.s32.totalorder %s541, 1
      %s545 = scalar_select %p544, %s541, 1
      %s546 = smul.addr %s543, 4
      %s547 = sadd.s32 %s545, %s546
      %s548 = smul.addr %s547, 8
      %s549 = scalar_lea.vmem %s5, %s548
      // Predicated region
      $region41: #{causal_trans_conv_block.3} parent=39 // pred_check
        %p550 = pneg %p160
      $region42: #{causal_trans_conv_block.3} parent=39 // pred_check_branch
        %552 = sbr.rel (%p550) target = $region44
      $region43: #{causal_trans_conv_block.3} parent=39 // pred_region
        %s553 = smul.u32 2, %s21
      $region44: #{causal_trans_conv_block.3} parent=39 // pred_fallthru
        _
    $region40: #{causal_trans_conv_block.3} parent=5 // pred_fallthru
      _
    %p554 = scmp.le.s32.totalorder 2, %s11
    // Predicated region
    $region45: #{causal_trans_conv_block.3} parent=5 // pred_check
      %p555 = pneg %p554
    $region46: #{causal_trans_conv_block.3} parent=5 // pred_check_branch
      %557 = sbr.rel (%p555) target = $region48
    $region47: #{causal_trans_conv_block.3} parent=5 // pred_region
      %s558 = ssub.s32 %s11, 2
      // Predicated region
      $region49: #{causal_trans_conv_block.3} parent=47 // pred_check
        %p559 = pneg %p166
      $region50: #{causal_trans_conv_block.3} parent=47 // pred_check_branch
        %561 = sbr.rel (%p559) target = $region52
      $region51: #{causal_trans_conv_block.3} parent=47 // pred_region
        %s562 = smul.u32 2, %s23
        %p563 = scmp.lt.s32.totalorder %s22, 1
        %s564 = scalar_select %p563, %s22, 1
        %p565 = scmp.lt.s32.totalorder %s562, 1
        %s566 = scalar_select %p565, %s562, 1
        %s567 = smul.addr %s564, 4
        %s568 = sadd.s32 %s566, %s567
        %s569 = smul.addr %s568, 8
        %s570 = scalar_lea.vmem %s5, %s569
      $region52: #{causal_trans_conv_block.3} parent=47 // pred_fallthru
        _
    $region48: #{causal_trans_conv_block.3} parent=5 // pred_fallthru
      _
  $region6: #{causal_trans_conv_block.3} parent=0 // loop_footer
    %s15 = sadd.s32 1, %s11
  $region7: #{causal_trans_conv_block.3} parent=0 // loop_footer_branch
    %10 = sbr.rel target = $region3
  $region8: #{causal_trans_conv_block.3} parent=0 // loop_exit
    _

</llo_original>
